<compile_context>
chip_gen: v7x
topology: tpu7x:2x2x1
jax: 0.10.0
libtpu: 0.0.40
codegen_flags: <defaults>
</compile_context>

<pallas_src>
import functools

import numpy as np
import jax
import jax.numpy as jnp
from jax import lax
from jax.experimental import pallas as pl
from jax.experimental.pallas import tpu as pltpu


# ----------------------------------------------------------------------------
# Shared in-kernel math helpers
# ----------------------------------------------------------------------------
def _run_fused_recurrence(gx_f, gx_r, w_hh, uni_out_ref, bi_out_ref,
                          *, hid, half, B, S):
    """Fused uni + bi-fwd + bi-rev LSTM recurrence.

    gx_f: (S*B, 4*H2) hoisted input gates for the uni and bi-forward
          components (+ all biases); bi-reverse columns hold only the bias.
    gx_r: (S*B, 4*H2) hoisted input gates for the bi-reverse component only
          (other columns are zero); read time-mirrored.
    w_hh: (H2, 4*H2) block-structured gate-major recurrent weights,
          H2 = hid + 2*half, column layout per gate block: [uni | bif | bir].
    PyTorch gate order i, f, g, o.  Zero initial (h, c).
    """
    H2 = hid + 2 * half
    h = jnp.zeros((B, H2), jnp.float32)
    c = jnp.zeros((B, H2), jnp.float32)
    hs_f = [None] * S
    hs_r = [None] * S
    for k in range(S):
        gates = (gx_f[k * B:(k + 1) * B, :]
                 + gx_r[(S - 1 - k) * B:(S - k) * B, :]
                 + jnp.dot(h, w_hh, preferred_element_type=jnp.float32))
        # Full-width activations: 2 transcendental ops per step for all three
        # LSTM directions together.
        sg = jax.nn.sigmoid(gates)
        tg = jnp.tanh(gates)
        i_a = sg[:, 0 * H2:1 * H2]
        f_a = sg[:, 1 * H2:2 * H2]
        g_a = tg[:, 2 * H2:3 * H2]
        o_a = sg[:, 3 * H2:4 * H2]
        c = f_a * c + i_a * g_a
        h = o_a * jnp.tanh(c)
        uni_out_ref[k * B:(k + 1) * B, :] = h[:, 0:hid]         # time k
        hs_f[k] = h[:, hid:hid + half]                          # time k
        hs_r[S - 1 - k] = h[:, hid + half:H2]                   # time S-1-k
    for t in range(S):
        # Lane-dense 2*half-wide row write; no concat / flip passes outside.
        bi_out_ref[t * B:(t + 1) * B, :] = jnp.concatenate(
            [hs_f[t], hs_r[t]], axis=-1)


def _head_math(lstm2d, bi2d, x2d,
               fc0a, fc0b, g0, be0, fc1, g1, be1, i2o_w, i2o_b, fc2_w, fc2_b):
    eps = 1e-5

    def layer_norm(v, g, beta):
        mu = jnp.mean(v, axis=-1, keepdims=True)
        vc = v - mu
        var = jnp.mean(vc * vc, axis=-1, keepdims=True)
        return vc * lax.rsqrt(var + eps) * g + beta

    # fc0 on cat([lstm, bilstm], -1) == lstm @ Wa + bilstm @ Wb   (bias=False)
    h0 = (jnp.dot(lstm2d, fc0a, preferred_element_type=jnp.float32)
          + jnp.dot(bi2d, fc0b, preferred_element_type=jnp.float32))
    h0 = layer_norm(jnp.maximum(h0, 0.0), g0, be0)
    h1 = jnp.maximum(jnp.dot(h0, fc1, preferred_element_type=jnp.float32), 0.0)
    h1 = layer_norm(h1, g1, be1)
    h1 = h1 + jnp.dot(x2d, i2o_w, preferred_element_type=jnp.float32) + i2o_b
    return jnp.dot(h1, fc2_w, preferred_element_type=jnp.float32) + fc2_b


# ----------------------------------------------------------------------------
# Pallas kernels
# ----------------------------------------------------------------------------
def _fused_kernel(x_ref, w_in_f, w_in_r, b_all, w_hh,
                  fc0a, fc0b, g0, be0, fc1, g1, be1, i2o_w, i2o_b, fc2_w, fc2_b,
                  o_ref, lstm_scr, bi_scr, *, hid, half, B, S):
    """Whole forward for num_layer == 1: fused LSTMs + MLP head, one call."""
    x2d = x_ref[...]
    xcat = jnp.concatenate([x2d, x2d], axis=1)    # uni & bif both read x
    gx_f = jnp.dot(xcat, w_in_f[...], preferred_element_type=jnp.float32) + b_all[...]
    gx_r = jnp.dot(x2d, w_in_r[...], preferred_element_type=jnp.float32)
    _run_fused_recurrence(gx_f, gx_r, w_hh[...], lstm_scr, bi_scr,
                          hid=hid, half=half, B=B, S=S)
    o_ref[...] = _head_math(lstm_scr[...], bi_scr[...], x2d,
                            fc0a[...], fc0b[...], g0[...], be0[...],
                            fc1[...], g1[...], be1[...],
                            i2o_w[...], i2o_b[...], fc2_w[...], fc2_b[...])


def _layer_kernel(xu_ref, xb_ref, w_in_f, w_in_r, b_all, w_hh,
                  u_out_ref, b_out_ref, *, hid, half, B, S):
    """One stacked layer (uni + bi LSTM fused) for the num_layer > 1 path."""
    xu = xu_ref[...]
    xb = xb_ref[...]
    xcat = jnp.concatenate([xu, xb], axis=1)
    gx_f = jnp.dot(xcat, w_in_f[...], preferred_element_type=jnp.float32) + b_all[...]
    gx_r = jnp.dot(xb, w_in_r[...], preferred_element_type=jnp.float32)
    _run_fused_recurrence(gx_f, gx_r, w_hh[...], u_out_ref, b_out_ref,
                          hid=hid, half=half, B=B, S=S)


def _head_kernel(lstm_ref, bi_ref, x_ref,
                 fc0a, fc0b, g0, be0, fc1, g1, be1, i2o_w, i2o_b, fc2_w, fc2_b,
                 o_ref):
    o_ref[...] = _head_math(lstm_ref[...], bi_ref[...], x_ref[...],
                            fc0a[...], fc0b[...], g0[...], be0[...],
                            fc1[...], g1[...], be1[...],
                            i2o_w[...], i2o_b[...], fc2_w[...], fc2_b[...])


# ----------------------------------------------------------------------------
# pallas_call wrappers
# ----------------------------------------------------------------------------
def _full_spec(shape):
    nd = len(shape)
    return pl.BlockSpec(shape, lambda *_, nd=nd: (0,) * nd)


_CPARAMS = pltpu.CompilerParams(dimension_semantics=("arbitrary",))


def fused_forward_pallas(x2d, p, hid, half, B, S, out_ch):
    L0 = p["layers"][0]
    args = (x2d, L0["w_in_f"], L0["w_in_r"], L0["b"], L0["w_hh"],
            p["fc0a_w"], p["fc0b_w"], p["norm0_g"], p["norm0_b"],
            p["fc1_w"], p["norm1_g"], p["norm1_b"],
            p["i2o_w"], p["i2o_b"], p["fc2_w"], p["fc2_b"])
    N = x2d.shape[0]
    kernel = functools.partial(_fused_kernel, hid=hid, half=half, B=B, S=S)
    return pl.pallas_call(
        kernel,
        out_shape=jax.ShapeDtypeStruct((N, out_ch), jnp.float32),
        grid=(1,),
        in_specs=[_full_spec(a.shape) for a in args],
        out_specs=_full_spec((N, out_ch)),
        scratch_shapes=[pltpu.VMEM((N, hid), jnp.float32),
                        pltpu.VMEM((N, 2 * half), jnp.float32)],
        compiler_params=_CPARAMS,
    )(*args)


def lstm_layer_pallas(xu2d, xb2d, lp, hid, half, B, S):
    N = xu2d.shape[0]
    args = (xu2d, xb2d, lp["w_in_f"], lp["w_in_r"], lp["b"], lp["w_hh"])
    kernel = functools.partial(_layer_kernel, hid=hid, half=half, B=B, S=S)
    return pl.pallas_call(
        kernel,
        out_shape=(jax.ShapeDtypeStruct((N, hid), jnp.float32),
                   jax.ShapeDtypeStruct((N, 2 * half), jnp.float32)),
        grid=(1,),
        in_specs=[_full_spec(a.shape) for a in args],
        out_specs=[_full_spec((N, hid)), _full_spec((N, 2 * half))],
        compiler_params=_CPARAMS,
    )(*args)


def head_pallas(lstm2d, bi2d, x2d, p):
    N = lstm2d.shape[0]
    out_ch = p["fc2_w"].shape[1]
    args = (lstm2d, bi2d, x2d,
            p["fc0a_w"], p["fc0b_w"], p["norm0_g"], p["norm0_b"],
            p["fc1_w"], p["norm1_g"], p["norm1_b"],
            p["i2o_w"], p["i2o_b"], p["fc2_w"], p["fc2_b"])
    return pl.pallas_call(
        _head_kernel,
        out_shape=jax.ShapeDtypeStruct((N, out_ch), jnp.float32),
        grid=(1,),
        in_specs=[_full_spec(a.shape) for a in args],
        out_specs=_full_spec((N, out_ch)),
        compiler_params=_CPARAMS,
    )(*args)


# ----------------------------------------------------------------------------
# Parameter init (deterministic, synthetic) + offline folding / packing
# ----------------------------------------------------------------------------
def init_params(seed, in_ch, hid, out_ch, num_layer):
    key = jax.random.PRNGKey(seed)
    ctr = [0]

    def nxt():
        ctr[0] += 1
        return jax.random.fold_in(key, ctr[0])

    def u(shape, fan_in):
        bound = 1.0 / float(fan_in) ** 0.5
        return jax.random.uniform(nxt(), shape, jnp.float32, -bound, bound)

    half = hid // 2
    p = {
        "i2l_w": u((in_ch, hid), in_ch), "i2l_b": u((1, hid), in_ch),
        "i2b_w": u((in_ch, hid), in_ch), "i2b_b": u((1, hid), in_ch),
        "i2o_w": u((in_ch, hid), in_ch), "i2o_b": u((1, hid), in_ch),
        "fc0a_w": u((hid, hid), 2 * hid), "fc0b_w": u((hid, hid), 2 * hid),
        "fc1_w": u((hid, hid), hid),
        "fc2_w": u((hid, out_ch), hid), "fc2_b": u((1, out_ch), hid),
        "norm0_g": jnp.ones((1, hid), jnp.float32),
        "norm0_b": jnp.zeros((1, hid), jnp.float32),
        "norm1_g": jnp.ones((1, hid), jnp.float32),
        "norm1_b": jnp.zeros((1, hid), jnp.float32),
        "lstm": [], "bilstm": [],
    }
    for _layer in range(num_layer):
        p["lstm"].append({
            "w_ih": u((hid, 4 * hid), hid),
            "w_hh": u((hid, 4 * hid), hid),
            "b": u((1, 4 * hid), hid) + u((1, 4 * hid), hid),     # b_ih + b_hh
        })
        p["bilstm"].append({
            "fwd": {"w_ih": u((hid, 4 * half), half),
                    "w_hh": u((half, 4 * half), half),
                    "b": u((1, 4 * half), half) + u((1, 4 * half), half)},
            "rev": {"w_ih": u((hid, 4 * half), half),
                    "w_hh": u((half, 4 * half), half),
                    "b": u((1, 4 * half), half) + u((1, 4 * half), half)},
        })
    return p


def _assemble_layer(*, w_ih_u, b_u, w_hh_u, w_ih_f, b_f, w_hh_f,
                    w_ih_r, b_r, w_hh_r, hid, half):
    """Pack one layer's uni / bi-fwd / bi-rev weights into fused gate-major
    block matrices.  H2 = hid + 2*half; per-gate column layout [uni|bif|bir].
    """
    H2 = hid + 2 * half
    hin_u = int(w_ih_u.shape[0])
    hin_b = int(w_ih_f.shape[0])
    w_in_fwd = np.zeros((hin_u + hin_b, 4 * H2), np.float32)
    w_in_rev = np.zeros((hin_b, 4 * H2), np.float32)
    b_all = np.zeros((1, 4 * H2), np.float32)
    w_hh = np.zeros((H2, 4 * H2), np.float32)
    comps = [
        # (w_ih, bias, w_hh, dst, row_off, col_off_in_gate_block, width, hh_row_off)
        (np.asarray(w_ih_u), np.asarray(b_u), np.asarray(w_hh_u),
         w_in_fwd, 0, 0, hid, 0),
        (np.asarray(w_ih_f), np.asarray(b_f), np.asarray(w_hh_f),
         w_in_fwd, hin_u, hid, half, hid),
        (np.asarray(w_ih_r), np.asarray(b_r), np.asarray(w_hh_r),
         w_in_rev, 0, hid + half, half, hid + half),
    ]
    for w_ih, b, whh, dst, roff, coff, h, hroff in comps:
        for g in range(4):                      # PyTorch gate order i, f, g, o
            cs = g * H2 + coff
            dst[roff:roff + w_ih.shape[0], cs:cs + h] = w_ih[:, g * h:(g + 1) * h]
            b_all[0, cs:cs + h] = b[0, g * h:(g + 1) * h]
            w_hh[hroff:hroff + h, cs:cs + h] = whh[:, g * h:(g + 1) * h]
    return (jnp.asarray(w_in_fwd), jnp.asarray(w_in_rev),
            jnp.asarray(b_all), jnp.asarray(w_hh))


def fold_params(raw, hid):
    """Fold input2lstm / input2bilstm into layer-0 LSTM weights (exact), and
    pack every layer's three LSTM directions into fused gate-major matrices."""
    half = hid // 2
    keep = ("i2o_w", "i2o_b", "fc0a_w", "fc0b_w", "fc1_w", "fc2_w", "fc2_b",
            "norm0_g", "norm0_b", "norm1_g", "norm1_b")
    p = {k: raw[k] for k in keep}
    layers = []
    for L in range(len(raw["lstm"])):
        lp = raw["lstm"][L]
        bf = raw["bilstm"][L]["fwd"]
        br = raw["bilstm"][L]["rev"]
        if L == 0:
            w_ih_u = raw["i2l_w"] @ lp["w_ih"]
            b_u = lp["b"] + raw["i2l_b"] @ lp["w_ih"]
            w_ih_f = raw["i2b_w"] @ bf["w_ih"]
            b_f = bf["b"] + raw["i2b_b"] @ bf["w_ih"]
            w_ih_r = raw["i2b_w"] @ br["w_ih"]
            b_r = br["b"] + raw["i2b_b"] @ br["w_ih"]
        else:
            w_ih_u, b_u = lp["w_ih"], lp["b"]
            w_ih_f, b_f = bf["w_ih"], bf["b"]
            w_ih_r, b_r = br["w_ih"], br["b"]
        w_in_f, w_in_r, b_all, w_hh = _assemble_layer(
            w_ih_u=w_ih_u, b_u=b_u, w_hh_u=lp["w_hh"],
            w_ih_f=w_ih_f, b_f=b_f, w_hh_f=bf["w_hh"],
            w_ih_r=w_ih_r, b_r=b_r, w_hh_r=br["w_hh"],
            hid=hid, half=half)
        layers.append({"w_in_f": w_in_f, "w_in_r": w_in_r,
                       "b": b_all, "w_hh": w_hh})
    p["layers"] = layers
    return p


# ----------------------------------------------------------------------------
# Full model forward (matches the PyTorch LSTM module semantics, eval mode)
# ----------------------------------------------------------------------------
def lstm_model_forward(inp, params, hid, out_ch, num_layer):
    B, S, Cin = inp.shape
    half = hid // 2
    # Time-major flatten: row (t*B + b) <-> (time t, batch b).  Everything
    # stays 2D (S*B, feat) until the very end (head is row-order agnostic).
    x2d = jnp.transpose(inp, (1, 0, 2)).reshape(S * B, Cin)

    if num_layer == 1:
        out2d = fused_forward_pallas(x2d, params, hid, half, B, S, out_ch)
    else:
        xu, xb = x2d, x2d
        for L in range(num_layer):
            xu, xb = lstm_layer_pallas(xu, xb, params["layers"][L],
                                       hid, half, B, S)
        out2d = head_pallas(xu, xb, x2d, params)

    return jnp.transpose(out2d.reshape(S, B, out_ch), (1, 0, 2))


# ----------------------------------------------------------------------------
# Pure-JAX reference (mirrors the PyTorch module, using RAW unfolded params)
# ----------------------------------------------------------------------------
def reference_forward(inp, raw, hid, num_layer):
    half = hid // 2

    def run_dir(x, w_ih, w_hh, b, hs, reverse):
        Bb, Ss, _ = x.shape
        h = jnp.zeros((Bb, hs), jnp.float32)
        c = jnp.zeros((Bb, hs), jnp.float32)
        outs = [None] * Ss
        order = range(Ss - 1, -1, -1) if reverse else range(Ss)
        for t in order:
            g = x[:, t, :] @ w_ih + h @ w_hh + b
            i = jax.nn.sigmoid(g[:, 0:hs])
            f = jax.nn.sigmoid(g[:, hs:2 * hs])
            gg = jnp.tanh(g[:, 2 * hs:3 * hs])
            o = jax.nn.sigmoid(g[:, 3 * hs:4 * hs])
            c = f * c + i * gg
            h = o * jnp.tanh(c)
            outs[t] = h
        return jnp.stack(outs, axis=1)

    lstm_in = inp @ raw["i2l_w"] + raw["i2l_b"]
    bilstm_in = inp @ raw["i2b_w"] + raw["i2b_b"]

    xu = lstm_in
    for L in range(num_layer):
        lp = raw["lstm"][L]
        xu = run_dir(xu, lp["w_ih"], lp["w_hh"], lp["b"], hid, False)
    xb = bilstm_in
    for L in range(num_layer):
        bp = raw["bilstm"][L]
        hf = run_dir(xb, bp["fwd"]["w_ih"], bp["fwd"]["w_hh"], bp["fwd"]["b"],
                     half, False)
        hr = run_dir(xb, bp["rev"]["w_ih"], bp["rev"]["w_hh"], bp["rev"]["b"],
                     half, True)
        xb = jnp.concatenate([hf, hr], axis=-1)

    def ln(v, g, b):
        mu = jnp.mean(v, axis=-1, keepdims=True)
        vc = v - mu
        var = jnp.mean(vc * vc, axis=-1, keepdims=True)
        return vc * lax.rsqrt(var + 1e-5) * g + b

    h0 = xu @ raw["fc0a_w"] + xb @ raw["fc0b_w"]
    h0 = ln(jnp.maximum(h0, 0.0), raw["norm0_g"], raw["norm0_b"])
    h1 = jnp.maximum(h0 @ raw["fc1_w"], 0.0)
    h1 = ln(h1, raw["norm1_g"], raw["norm1_b"]) + (inp @ raw["i2o_w"] + raw["i2o_b"])
    return h1 @ raw["fc2_w"] + raw["fc2_b"]


if __name__ == "__main__":
    # opt: in_channels=4, hid_channels=32, out_channels=2, num_layer=1, p=0.1
    IN_CH, HID, OUT_CH = 4, 32, 2
    B, S = 2, 8
    x = jax.random.normal(jax.random.PRNGKey(0), (B, S, IN_CH), jnp.float32)

    for num_layer in (1, 2):
        raw = init_params(seed=42, in_ch=IN_CH, hid=HID, out_ch=OUT_CH,
                          num_layer=num_layer)
        params = fold_params(raw, HID)
        fwd = jax.jit(functools.partial(lstm_model_forward, hid=HID,
                                        out_ch=OUT_CH, num_layer=num_layer))
        out = jax.block_until_ready(fwd(x, params))
        assert out.shape == (B, S, OUT_CH)
        assert bool(jnp.all(jnp.isfinite(out)))
        ref = reference_forward(x, raw, HID, num_layer)
        err = float(jnp.max(jnp.abs(out - ref)))
        assert err < 1e-3, f"num_layer={num_layer}: mismatch vs reference {err}"

    print("KERNEL_OK")
</pallas_src>

<mosaic_0001>
module attributes {stable_mosaic.version = 11 : i64} {
  func.func @_fused_kernel(%arg0: i32, %arg1: memref<16x4xf32, #tpu.memory_space<vmem>>, %arg2: memref<8x256xf32, #tpu.memory_space<vmem>>, %arg3: memref<4x256xf32, #tpu.memory_space<vmem>>, %arg4: memref<1x256xf32, #tpu.memory_space<vmem>>, %arg5: memref<64x256xf32, #tpu.memory_space<vmem>>, %arg6: memref<32x32xf32, #tpu.memory_space<vmem>>, %arg7: memref<32x32xf32, #tpu.memory_space<vmem>>, %arg8: memref<1x32xf32, #tpu.memory_space<vmem>>, %arg9: memref<1x32xf32, #tpu.memory_space<vmem>>, %arg10: memref<32x32xf32, #tpu.memory_space<vmem>>, %arg11: memref<1x32xf32, #tpu.memory_space<vmem>>, %arg12: memref<1x32xf32, #tpu.memory_space<vmem>>, %arg13: memref<4x32xf32, #tpu.memory_space<vmem>>, %arg14: memref<1x32xf32, #tpu.memory_space<vmem>>, %arg15: memref<32x2xf32, #tpu.memory_space<vmem>>, %arg16: memref<1x2xf32, #tpu.memory_space<vmem>>, %arg17: memref<16x2xf32, #tpu.memory_space<vmem>>, %arg18: memref<16x32xf32, #tpu.memory_space<vmem>>, %arg19: memref<16x32xf32, #tpu.memory_space<vmem>>) attributes {dimension_semantics = [#tpu.dimension_semantics<arbitrary>], iteration_bounds = array<i64: 1>, scalar_prefetch = 0 : i64, scratch_operands = 2 : i64, tpu.core_type = #tpu.core_type<tc>, window_params = [{pipeline_mode = #tpu.pipeline_mode<synchronous>, transform_indices = @transform_0, window_bounds = array<i64: 16, 4>}, {pipeline_mode = #tpu.pipeline_mode<synchronous>, transform_indices = @transform_1, window_bounds = array<i64: 8, 256>}, {pipeline_mode = #tpu.pipeline_mode<synchronous>, transform_indices = @transform_2, window_bounds = array<i64: 4, 256>}, {pipeline_mode = #tpu.pipeline_mode<synchronous>, transform_indices = @transform_3, window_bounds = array<i64: 1, 256>}, {pipeline_mode = #tpu.pipeline_mode<synchronous>, transform_indices = @transform_4, window_bounds = array<i64: 64, 256>}, {pipeline_mode = #tpu.pipeline_mode<synchronous>, transform_indices = @transform_5, window_bounds = array<i64: 32, 32>}, {pipeline_mode = #tpu.pipeline_mode<synchronous>, transform_indices = @transform_6, window_bounds = array<i64: 32, 32>}, {pipeline_mode = #tpu.pipeline_mode<synchronous>, transform_indices = @transform_7, window_bounds = array<i64: 1, 32>}, {pipeline_mode = #tpu.pipeline_mode<synchronous>, transform_indices = @transform_8, window_bounds = array<i64: 1, 32>}, {pipeline_mode = #tpu.pipeline_mode<synchronous>, transform_indices = @transform_9, window_bounds = array<i64: 32, 32>}, {pipeline_mode = #tpu.pipeline_mode<synchronous>, transform_indices = @transform_10, window_bounds = array<i64: 1, 32>}, {pipeline_mode = #tpu.pipeline_mode<synchronous>, transform_indices = @transform_11, window_bounds = array<i64: 1, 32>}, {pipeline_mode = #tpu.pipeline_mode<synchronous>, transform_indices = @transform_12, window_bounds = array<i64: 4, 32>}, {pipeline_mode = #tpu.pipeline_mode<synchronous>, transform_indices = @transform_13, window_bounds = array<i64: 1, 32>}, {pipeline_mode = #tpu.pipeline_mode<synchronous>, transform_indices = @transform_14, window_bounds = array<i64: 32, 2>}, {pipeline_mode = #tpu.pipeline_mode<synchronous>, transform_indices = @transform_15, window_bounds = array<i64: 1, 2>}, {pipeline_mode = #tpu.pipeline_mode<synchronous>, transform_indices = @transform_16, window_bounds = array<i64: 16, 2>}]} {
    %c0 = arith.constant 0 : index
    %c0_0 = arith.constant 0 : index
    %0 = vector.load %arg1[%c0, %c0_0] : memref<16x4xf32, #tpu.memory_space<vmem>>, vector<16x4xf32>
    %1 = tpu.concatenate %0, %0 in 1 : vector<16x4xf32>, vector<16x4xf32> -> vector<16x8xf32>
    %c0_1 = arith.constant 0 : index
    %c0_2 = arith.constant 0 : index
    %2 = vector.load %arg2[%c0_1, %c0_2] : memref<8x256xf32, #tpu.memory_space<vmem>>, vector<8x256xf32>
    %cst = arith.constant dense<0.000000e+00> : vector<16x256xf32>
    %3 = tpu.matmul %1, %2, %cst {dimension_numbers = #tpu.dot_dimension_numbers<[1], [0], [0], [1], [0, 0, 1, 1], [], []>} : vector<16x8xf32>, vector<8x256xf32>, vector<16x256xf32> -> vector<16x256xf32>
    %c0_3 = arith.constant 0 : index
    %c0_4 = arith.constant 0 : index
    %4 = vector.load %arg4[%c0_3, %c0_4] : memref<1x256xf32, #tpu.memory_space<vmem>>, vector<1x256xf32>
    %5 = vector.broadcast %4 : vector<1x256xf32> to vector<16x256xf32>
    %6 = arith.addf %3, %5 : vector<16x256xf32>
    %c0_5 = arith.constant 0 : index
    %c0_6 = arith.constant 0 : index
    %7 = vector.load %arg3[%c0_5, %c0_6] : memref<4x256xf32, #tpu.memory_space<vmem>>, vector<4x256xf32>
    %cst_7 = arith.constant dense<0.000000e+00> : vector<16x256xf32>
    %8 = tpu.matmul %0, %7, %cst_7 {dimension_numbers = #tpu.dot_dimension_numbers<[1], [0], [0], [1], [0, 0, 1, 1], [], []>} : vector<16x4xf32>, vector<4x256xf32>, vector<16x256xf32> -> vector<16x256xf32>
    %c0_8 = arith.constant 0 : index
    %c0_9 = arith.constant 0 : index
    %9 = vector.load %arg5[%c0_8, %c0_9] : memref<64x256xf32, #tpu.memory_space<vmem>>, vector<64x256xf32>
    %cst_10 = arith.constant 0.000000e+00 : f32
    %10 = vector.broadcast %cst_10 : f32 to vector<2x64xf32>
    %cst_11 = arith.constant 0.000000e+00 : f32
    %11 = vector.broadcast %cst_11 : f32 to vector<2x64xf32>
    %12 = vector.extract_strided_slice %6 {offsets = [0, 0], sizes = [2, 256], strides = [1, 1]} : vector<16x256xf32> to vector<2x256xf32>
    %13 = vector.extract_strided_slice %8 {offsets = [14, 0], sizes = [2, 256], strides = [1, 1]} : vector<16x256xf32> to vector<2x256xf32>
    %14 = arith.addf %12, %13 : vector<2x256xf32>
    %cst_12 = arith.constant dense<0.000000e+00> : vector<2x256xf32>
    %15 = tpu.matmul %10, %9, %cst_12 {dimension_numbers = #tpu.dot_dimension_numbers<[1], [0], [0], [1], [0, 0, 1, 1], [], []>} : vector<2x64xf32>, vector<64x256xf32>, vector<2x256xf32> -> vector<2x256xf32>
    %16 = arith.addf %14, %15 : vector<2x256xf32>
    %17 = arith.negf %16 : vector<2x256xf32>
    %18 = math.exp %17 : vector<2x256xf32>
    %cst_13 = arith.constant 1.000000e+00 : f32
    %19 = vector.broadcast %cst_13 : f32 to vector<2x256xf32>
    %20 = arith.addf %19, %18 : vector<2x256xf32>
    %21 = arith.divf %19, %20 : vector<2x256xf32>
    %22 = math.tanh %16 : vector<2x256xf32>
    %23 = vector.extract_strided_slice %21 {offsets = [0, 0], sizes = [2, 64], strides = [1, 1]} : vector<2x256xf32> to vector<2x64xf32>
    %24 = vector.extract_strided_slice %21 {offsets = [0, 64], sizes = [2, 64], strides = [1, 1]} : vector<2x256xf32> to vector<2x64xf32>
    %25 = vector.extract_strided_slice %22 {offsets = [0, 128], sizes = [2, 64], strides = [1, 1]} : vector<2x256xf32> to vector<2x64xf32>
    %26 = vector.extract_strided_slice %21 {offsets = [0, 192], sizes = [2, 64], strides = [1, 1]} : vector<2x256xf32> to vector<2x64xf32>
    %27 = arith.mulf %24, %11 : vector<2x64xf32>
    %28 = arith.mulf %23, %25 : vector<2x64xf32>
    %29 = arith.addf %27, %28 : vector<2x64xf32>
    %30 = math.tanh %29 : vector<2x64xf32>
    %31 = arith.mulf %26, %30 : vector<2x64xf32>
    %32 = vector.extract_strided_slice %31 {offsets = [0, 0], sizes = [2, 32], strides = [1, 1]} : vector<2x64xf32> to vector<2x32xf32>
    %c0_14 = arith.constant 0 : index
    %c0_15 = arith.constant 0 : index
    %33 = vector.load %arg18[%c0_14, %c0_15] : memref<16x32xf32, #tpu.memory_space<vmem>>, vector<2x32xf32>
    tpu.vector_store %arg18[%c0_14, %c0_15], %32 {strides = array<i32>} : memref<16x32xf32, #tpu.memory_space<vmem>>, vector<2x32xf32>,
    %34 = vector.extract_strided_slice %31 {offsets = [0, 32], sizes = [2, 16], strides = [1, 1]} : vector<2x64xf32> to vector<2x16xf32>
    %35 = vector.extract_strided_slice %31 {offsets = [0, 48], sizes = [2, 16], strides = [1, 1]} : vector<2x64xf32> to vector<2x16xf32>
    %36 = vector.extract_strided_slice %6 {offsets = [2, 0], sizes = [2, 256], strides = [1, 1]} : vector<16x256xf32> to vector<2x256xf32>
    %37 = vector.extract_strided_slice %8 {offsets = [12, 0], sizes = [2, 256], strides = [1, 1]} : vector<16x256xf32> to vector<2x256xf32>
    %38 = arith.addf %36, %37 : vector<2x256xf32>
    %cst_16 = arith.constant dense<0.000000e+00> : vector<2x256xf32>
    %39 = tpu.matmul %31, %9, %cst_16 {dimension_numbers = #tpu.dot_dimension_numbers<[1], [0], [0], [1], [0, 0, 1, 1], [], []>} : vector<2x64xf32>, vector<64x256xf32>, vector<2x256xf32> -> vector<2x256xf32>
    %40 = arith.addf %38, %39 : vector<2x256xf32>
    %41 = arith.negf %40 : vector<2x256xf32>
    %42 = math.exp %41 : vector<2x256xf32>
    %cst_17 = arith.constant 1.000000e+00 : f32
    %43 = vector.broadcast %cst_17 : f32 to vector<2x256xf32>
    %44 = arith.addf %43, %42 : vector<2x256xf32>
    %45 = arith.divf %43, %44 : vector<2x256xf32>
    %46 = math.tanh %40 : vector<2x256xf32>
    %47 = vector.extract_strided_slice %45 {offsets = [0, 0], sizes = [2, 64], strides = [1, 1]} : vector<2x256xf32> to vector<2x64xf32>
    %48 = vector.extract_strided_slice %45 {offsets = [0, 64], sizes = [2, 64], strides = [1, 1]} : vector<2x256xf32> to vector<2x64xf32>
    %49 = vector.extract_strided_slice %46 {offsets = [0, 128], sizes = [2, 64], strides = [1, 1]} : vector<2x256xf32> to vector<2x64xf32>
    %50 = vector.extract_strided_slice %45 {offsets = [0, 192], sizes = [2, 64], strides = [1, 1]} : vector<2x256xf32> to vector<2x64xf32>
    %51 = arith.mulf %48, %29 : vector<2x64xf32>
    %52 = arith.mulf %47, %49 : vector<2x64xf32>
    %53 = arith.addf %51, %52 : vector<2x64xf32>
    %54 = math.tanh %53 : vector<2x64xf32>
    %55 = arith.mulf %50, %54 : vector<2x64xf32>
    %56 = vector.extract_strided_slice %55 {offsets = [0, 0], sizes = [2, 32], strides = [1, 1]} : vector<2x64xf32> to vector<2x32xf32>
    %c2 = arith.constant 2 : index
    %c0_18 = arith.constant 0 : index
    %57 = vector.load %arg18[%c2, %c0_18] : memref<16x32xf32, #tpu.memory_space<vmem>>, vector<2x32xf32>
    tpu.vector_store %arg18[%c2, %c0_18], %56 {strides = array<i32>} : memref<16x32xf32, #tpu.memory_space<vmem>>, vector<2x32xf32>,
    %58 = vector.extract_strided_slice %55 {offsets = [0, 32], sizes = [2, 16], strides = [1, 1]} : vector<2x64xf32> to vector<2x16xf32>
    %59 = vector.extract_strided_slice %55 {offsets = [0, 48], sizes = [2, 16], strides = [1, 1]} : vector<2x64xf32> to vector<2x16xf32>
    %60 = vector.extract_strided_slice %6 {offsets = [4, 0], sizes = [2, 256], strides = [1, 1]} : vector<16x256xf32> to vector<2x256xf32>
    %61 = vector.extract_strided_slice %8 {offsets = [10, 0], sizes = [2, 256], strides = [1, 1]} : vector<16x256xf32> to vector<2x256xf32>
    %62 = arith.addf %60, %61 : vector<2x256xf32>
    %cst_19 = arith.constant dense<0.000000e+00> : vector<2x256xf32>
    %63 = tpu.matmul %55, %9, %cst_19 {dimension_numbers = #tpu.dot_dimension_numbers<[1], [0], [0], [1], [0, 0, 1, 1], [], []>} : vector<2x64xf32>, vector<64x256xf32>, vector<2x256xf32> -> vector<2x256xf32>
    %64 = arith.addf %62, %63 : vector<2x256xf32>
    %65 = arith.negf %64 : vector<2x256xf32>
    %66 = math.exp %65 : vector<2x256xf32>
    %cst_20 = arith.constant 1.000000e+00 : f32
    %67 = vector.broadcast %cst_20 : f32 to vector<2x256xf32>
    %68 = arith.addf %67, %66 : vector<2x256xf32>
    %69 = arith.divf %67, %68 : vector<2x256xf32>
    %70 = math.tanh %64 : vector<2x256xf32>
    %71 = vector.extract_strided_slice %69 {offsets = [0, 0], sizes = [2, 64], strides = [1, 1]} : vector<2x256xf32> to vector<2x64xf32>
    %72 = vector.extract_strided_slice %69 {offsets = [0, 64], sizes = [2, 64], strides = [1, 1]} : vector<2x256xf32> to vector<2x64xf32>
    %73 = vector.extract_strided_slice %70 {offsets = [0, 128], sizes = [2, 64], strides = [1, 1]} : vector<2x256xf32> to vector<2x64xf32>
    %74 = vector.extract_strided_slice %69 {offsets = [0, 192], sizes = [2, 64], strides = [1, 1]} : vector<2x256xf32> to vector<2x64xf32>
    %75 = arith.mulf %72, %53 : vector<2x64xf32>
    %76 = arith.mulf %71, %73 : vector<2x64xf32>
    %77 = arith.addf %75, %76 : vector<2x64xf32>
    %78 = math.tanh %77 : vector<2x64xf32>
    %79 = arith.mulf %74, %78 : vector<2x64xf32>
    %80 = vector.extract_strided_slice %79 {offsets = [0, 0], sizes = [2, 32], strides = [1, 1]} : vector<2x64xf32> to vector<2x32xf32>
    %c4 = arith.constant 4 : index
    %c0_21 = arith.constant 0 : index
    %81 = vector.load %arg18[%c4, %c0_21] : memref<16x32xf32, #tpu.memory_space<vmem>>, vector<2x32xf32>
    tpu.vector_store %arg18[%c4, %c0_21], %80 {strides = array<i32>} : memref<16x32xf32, #tpu.memory_space<vmem>>, vector<2x32xf32>,
    %82 = vector.extract_strided_slice %79 {offsets = [0, 32], sizes = [2, 16], strides = [1, 1]} : vector<2x64xf32> to vector<2x16xf32>
    %83 = vector.extract_strided_slice %79 {offsets = [0, 48], sizes = [2, 16], strides = [1, 1]} : vector<2x64xf32> to vector<2x16xf32>
    %84 = vector.extract_strided_slice %6 {offsets = [6, 0], sizes = [2, 256], strides = [1, 1]} : vector<16x256xf32> to vector<2x256xf32>
    %85 = vector.extract_strided_slice %8 {offsets = [8, 0], sizes = [2, 256], strides = [1, 1]} : vector<16x256xf32> to vector<2x256xf32>
    %86 = arith.addf %84, %85 : vector<2x256xf32>
    %cst_22 = arith.constant dense<0.000000e+00> : vector<2x256xf32>
    %87 = tpu.matmul %79, %9, %cst_22 {dimension_numbers = #tpu.dot_dimension_numbers<[1], [0], [0], [1], [0, 0, 1, 1], [], []>} : vector<2x64xf32>, vector<64x256xf32>, vector<2x256xf32> -> vector<2x256xf32>
    %88 = arith.addf %86, %87 : vector<2x256xf32>
    %89 = arith.negf %88 : vector<2x256xf32>
    %90 = math.exp %89 : vector<2x256xf32>
    %cst_23 = arith.constant 1.000000e+00 : f32
    %91 = vector.broadcast %cst_23 : f32 to vector<2x256xf32>
    %92 = arith.addf %91, %90 : vector<2x256xf32>
    %93 = arith.divf %91, %92 : vector<2x256xf32>
    %94 = math.tanh %88 : vector<2x256xf32>
    %95 = vector.extract_strided_slice %93 {offsets = [0, 0], sizes = [2, 64], strides = [1, 1]} : vector<2x256xf32> to vector<2x64xf32>
    %96 = vector.extract_strided_slice %93 {offsets = [0, 64], sizes = [2, 64], strides = [1, 1]} : vector<2x256xf32> to vector<2x64xf32>
    %97 = vector.extract_strided_slice %94 {offsets = [0, 128], sizes = [2, 64], strides = [1, 1]} : vector<2x256xf32> to vector<2x64xf32>
    %98 = vector.extract_strided_slice %93 {offsets = [0, 192], sizes = [2, 64], strides = [1, 1]} : vector<2x256xf32> to vector<2x64xf32>
    %99 = arith.mulf %96, %77 : vector<2x64xf32>
    %100 = arith.mulf %95, %97 : vector<2x64xf32>
    %101 = arith.addf %99, %100 : vector<2x64xf32>
    %102 = math.tanh %101 : vector<2x64xf32>
    %103 = arith.mulf %98, %102 : vector<2x64xf32>
    %104 = vector.extract_strided_slice %103 {offsets = [0, 0], sizes = [2, 32], strides = [1, 1]} : vector<2x64xf32> to vector<2x32xf32>
    %c6 = arith.constant 6 : index
    %c0_24 = arith.constant 0 : index
    %105 = vector.load %arg18[%c6, %c0_24] : memref<16x32xf32, #tpu.memory_space<vmem>>, vector<2x32xf32>
    tpu.vector_store %arg18[%c6, %c0_24], %104 {strides = array<i32>} : memref<16x32xf32, #tpu.memory_space<vmem>>, vector<2x32xf32>,
    %106 = vector.extract_strided_slice %103 {offsets = [0, 32], sizes = [2, 16], strides = [1, 1]} : vector<2x64xf32> to vector<2x16xf32>
    %107 = vector.extract_strided_slice %103 {offsets = [0, 48], sizes = [2, 16], strides = [1, 1]} : vector<2x64xf32> to vector<2x16xf32>
    %108 = vector.extract_strided_slice %6 {offsets = [8, 0], sizes = [2, 256], strides = [1, 1]} : vector<16x256xf32> to vector<2x256xf32>
    %109 = vector.extract_strided_slice %8 {offsets = [6, 0], sizes = [2, 256], strides = [1, 1]} : vector<16x256xf32> to vector<2x256xf32>
    %110 = arith.addf %108, %109 : vector<2x256xf32>
    %cst_25 = arith.constant dense<0.000000e+00> : vector<2x256xf32>
    %111 = tpu.matmul %103, %9, %cst_25 {dimension_numbers = #tpu.dot_dimension_numbers<[1], [0], [0], [1], [0, 0, 1, 1], [], []>} : vector<2x64xf32>, vector<64x256xf32>, vector<2x256xf32> -> vector<2x256xf32>
    %112 = arith.addf %110, %111 : vector<2x256xf32>
    %113 = arith.negf %112 : vector<2x256xf32>
    %114 = math.exp %113 : vector<2x256xf32>
    %cst_26 = arith.constant 1.000000e+00 : f32
    %115 = vector.broadcast %cst_26 : f32 to vector<2x256xf32>
    %116 = arith.addf %115, %114 : vector<2x256xf32>
    %117 = arith.divf %115, %116 : vector<2x256xf32>
    %118 = math.tanh %112 : vector<2x256xf32>
    %119 = vector.extract_strided_slice %117 {offsets = [0, 0], sizes = [2, 64], strides = [1, 1]} : vector<2x256xf32> to vector<2x64xf32>
    %120 = vector.extract_strided_slice %117 {offsets = [0, 64], sizes = [2, 64], strides = [1, 1]} : vector<2x256xf32> to vector<2x64xf32>
    %121 = vector.extract_strided_slice %118 {offsets = [0, 128], sizes = [2, 64], strides = [1, 1]} : vector<2x256xf32> to vector<2x64xf32>
    %122 = vector.extract_strided_slice %117 {offsets = [0, 192], sizes = [2, 64], strides = [1, 1]} : vector<2x256xf32> to vector<2x64xf32>
    %123 = arith.mulf %120, %101 : vector<2x64xf32>
    %124 = arith.mulf %119, %121 : vector<2x64xf32>
    %125 = arith.addf %123, %124 : vector<2x64xf32>
    %126 = math.tanh %125 : vector<2x64xf32>
    %127 = arith.mulf %122, %126 : vector<2x64xf32>
    %128 = vector.extract_strided_slice %127 {offsets = [0, 0], sizes = [2, 32], strides = [1, 1]} : vector<2x64xf32> to vector<2x32xf32>
    %c8 = arith.constant 8 : index
    %c0_27 = arith.constant 0 : index
    %129 = vector.load %arg18[%c8, %c0_27] : memref<16x32xf32, #tpu.memory_space<vmem>>, vector<2x32xf32>
    tpu.vector_store %arg18[%c8, %c0_27], %128 {strides = array<i32>} : memref<16x32xf32, #tpu.memory_space<vmem>>, vector<2x32xf32>,
    %130 = vector.extract_strided_slice %127 {offsets = [0, 32], sizes = [2, 16], strides = [1, 1]} : vector<2x64xf32> to vector<2x16xf32>
    %131 = vector.extract_strided_slice %127 {offsets = [0, 48], sizes = [2, 16], strides = [1, 1]} : vector<2x64xf32> to vector<2x16xf32>
    %132 = vector.extract_strided_slice %6 {offsets = [10, 0], sizes = [2, 256], strides = [1, 1]} : vector<16x256xf32> to vector<2x256xf32>
    %133 = vector.extract_strided_slice %8 {offsets = [4, 0], sizes = [2, 256], strides = [1, 1]} : vector<16x256xf32> to vector<2x256xf32>
    %134 = arith.addf %132, %133 : vector<2x256xf32>
    %cst_28 = arith.constant dense<0.000000e+00> : vector<2x256xf32>
    %135 = tpu.matmul %127, %9, %cst_28 {dimension_numbers = #tpu.dot_dimension_numbers<[1], [0], [0], [1], [0, 0, 1, 1], [], []>} : vector<2x64xf32>, vector<64x256xf32>, vector<2x256xf32> -> vector<2x256xf32>
    %136 = arith.addf %134, %135 : vector<2x256xf32>
    %137 = arith.negf %136 : vector<2x256xf32>
    %138 = math.exp %137 : vector<2x256xf32>
    %cst_29 = arith.constant 1.000000e+00 : f32
    %139 = vector.broadcast %cst_29 : f32 to vector<2x256xf32>
    %140 = arith.addf %139, %138 : vector<2x256xf32>
    %141 = arith.divf %139, %140 : vector<2x256xf32>
    %142 = math.tanh %136 : vector<2x256xf32>
    %143 = vector.extract_strided_slice %141 {offsets = [0, 0], sizes = [2, 64], strides = [1, 1]} : vector<2x256xf32> to vector<2x64xf32>
    %144 = vector.extract_strided_slice %141 {offsets = [0, 64], sizes = [2, 64], strides = [1, 1]} : vector<2x256xf32> to vector<2x64xf32>
    %145 = vector.extract_strided_slice %142 {offsets = [0, 128], sizes = [2, 64], strides = [1, 1]} : vector<2x256xf32> to vector<2x64xf32>
    %146 = vector.extract_strided_slice %141 {offsets = [0, 192], sizes = [2, 64], strides = [1, 1]} : vector<2x256xf32> to vector<2x64xf32>
    %147 = arith.mulf %144, %125 : vector<2x64xf32>
    %148 = arith.mulf %143, %145 : vector<2x64xf32>
    %149 = arith.addf %147, %148 : vector<2x64xf32>
    %150 = math.tanh %149 : vector<2x64xf32>
    %151 = arith.mulf %146, %150 : vector<2x64xf32>
    %152 = vector.extract_strided_slice %151 {offsets = [0, 0], sizes = [2, 32], strides = [1, 1]} : vector<2x64xf32> to vector<2x32xf32>
    %c10 = arith.constant 10 : index
    %c0_30 = arith.constant 0 : index
    %153 = vector.load %arg18[%c10, %c0_30] : memref<16x32xf32, #tpu.memory_space<vmem>>, vector<2x32xf32>
    tpu.vector_store %arg18[%c10, %c0_30], %152 {strides = array<i32>} : memref<16x32xf32, #tpu.memory_space<vmem>>, vector<2x32xf32>,
    %154 = vector.extract_strided_slice %151 {offsets = [0, 32], sizes = [2, 16], strides = [1, 1]} : vector<2x64xf32> to vector<2x16xf32>
    %155 = vector.extract_strided_slice %151 {offsets = [0, 48], sizes = [2, 16], strides = [1, 1]} : vector<2x64xf32> to vector<2x16xf32>
    %156 = vector.extract_strided_slice %6 {offsets = [12, 0], sizes = [2, 256], strides = [1, 1]} : vector<16x256xf32> to vector<2x256xf32>
    %157 = vector.extract_strided_slice %8 {offsets = [2, 0], sizes = [2, 256], strides = [1, 1]} : vector<16x256xf32> to vector<2x256xf32>
    %158 = arith.addf %156, %157 : vector<2x256xf32>
    %cst_31 = arith.constant dense<0.000000e+00> : vector<2x256xf32>
    %159 = tpu.matmul %151, %9, %cst_31 {dimension_numbers = #tpu.dot_dimension_numbers<[1], [0], [0], [1], [0, 0, 1, 1], [], []>} : vector<2x64xf32>, vector<64x256xf32>, vector<2x256xf32> -> vector<2x256xf32>
    %160 = arith.addf %158, %159 : vector<2x256xf32>
    %161 = arith.negf %160 : vector<2x256xf32>
    %162 = math.exp %161 : vector<2x256xf32>
    %cst_32 = arith.constant 1.000000e+00 : f32
    %163 = vector.broadcast %cst_32 : f32 to vector<2x256xf32>
    %164 = arith.addf %163, %162 : vector<2x256xf32>
    %165 = arith.divf %163, %164 : vector<2x256xf32>
    %166 = math.tanh %160 : vector<2x256xf32>
    %167 = vector.extract_strided_slice %165 {offsets = [0, 0], sizes = [2, 64], strides = [1, 1]} : vector<2x256xf32> to vector<2x64xf32>
    %168 = vector.extract_strided_slice %165 {offsets = [0, 64], sizes = [2, 64], strides = [1, 1]} : vector<2x256xf32> to vector<2x64xf32>
    %169 = vector.extract_strided_slice %166 {offsets = [0, 128], sizes = [2, 64], strides = [1, 1]} : vector<2x256xf32> to vector<2x64xf32>
    %170 = vector.extract_strided_slice %165 {offsets = [0, 192], sizes = [2, 64], strides = [1, 1]} : vector<2x256xf32> to vector<2x64xf32>
    %171 = arith.mulf %168, %149 : vector<2x64xf32>
    %172 = arith.mulf %167, %169 : vector<2x64xf32>
    %173 = arith.addf %171, %172 : vector<2x64xf32>
    %174 = math.tanh %173 : vector<2x64xf32>
    %175 = arith.mulf %170, %174 : vector<2x64xf32>
    %176 = vector.extract_strided_slice %175 {offsets = [0, 0], sizes = [2, 32], strides = [1, 1]} : vector<2x64xf32> to vector<2x32xf32>
    %c12 = arith.constant 12 : index
    %c0_33 = arith.constant 0 : index
    %177 = vector.load %arg18[%c12, %c0_33] : memref<16x32xf32, #tpu.memory_space<vmem>>, vector<2x32xf32>
    tpu.vector_store %arg18[%c12, %c0_33], %176 {strides = array<i32>} : memref<16x32xf32, #tpu.memory_space<vmem>>, vector<2x32xf32>,
    %178 = vector.extract_strided_slice %175 {offsets = [0, 32], sizes = [2, 16], strides = [1, 1]} : vector<2x64xf32> to vector<2x16xf32>
    %179 = vector.extract_strided_slice %175 {offsets = [0, 48], sizes = [2, 16], strides = [1, 1]} : vector<2x64xf32> to vector<2x16xf32>
    %180 = vector.extract_strided_slice %6 {offsets = [14, 0], sizes = [2, 256], strides = [1, 1]} : vector<16x256xf32> to vector<2x256xf32>
    %181 = vector.extract_strided_slice %8 {offsets = [0, 0], sizes = [2, 256], strides = [1, 1]} : vector<16x256xf32> to vector<2x256xf32>
    %182 = arith.addf %180, %181 : vector<2x256xf32>
    %cst_34 = arith.constant dense<0.000000e+00> : vector<2x256xf32>
    %183 = tpu.matmul %175, %9, %cst_34 {dimension_numbers = #tpu.dot_dimension_numbers<[1], [0], [0], [1], [0, 0, 1, 1], [], []>} : vector<2x64xf32>, vector<64x256xf32>, vector<2x256xf32> -> vector<2x256xf32>
    %184 = arith.addf %182, %183 : vector<2x256xf32>
    %185 = arith.negf %184 : vector<2x256xf32>
    %186 = math.exp %185 : vector<2x256xf32>
    %cst_35 = arith.constant 1.000000e+00 : f32
    %187 = vector.broadcast %cst_35 : f32 to vector<2x256xf32>
    %188 = arith.addf %187, %186 : vector<2x256xf32>
    %189 = arith.divf %187, %188 : vector<2x256xf32>
    %190 = math.tanh %184 : vector<2x256xf32>
    %191 = vector.extract_strided_slice %189 {offsets = [0, 0], sizes = [2, 64], strides = [1, 1]} : vector<2x256xf32> to vector<2x64xf32>
    %192 = vector.extract_strided_slice %189 {offsets = [0, 64], sizes = [2, 64], strides = [1, 1]} : vector<2x256xf32> to vector<2x64xf32>
    %193 = vector.extract_strided_slice %190 {offsets = [0, 128], sizes = [2, 64], strides = [1, 1]} : vector<2x256xf32> to vector<2x64xf32>
    %194 = vector.extract_strided_slice %189 {offsets = [0, 192], sizes = [2, 64], strides = [1, 1]} : vector<2x256xf32> to vector<2x64xf32>
    %195 = arith.mulf %192, %173 : vector<2x64xf32>
    %196 = arith.mulf %191, %193 : vector<2x64xf32>
    %197 = arith.addf %195, %196 : vector<2x64xf32>
    %198 = math.tanh %197 : vector<2x64xf32>
    %199 = arith.mulf %194, %198 : vector<2x64xf32>
    %200 = vector.extract_strided_slice %199 {offsets = [0, 0], sizes = [2, 32], strides = [1, 1]} : vector<2x64xf32> to vector<2x32xf32>
    %c14 = arith.constant 14 : index
    %c0_36 = arith.constant 0 : index
    %201 = vector.load %arg18[%c14, %c0_36] : memref<16x32xf32, #tpu.memory_space<vmem>>, vector<2x32xf32>
    tpu.vector_store %arg18[%c14, %c0_36], %200 {strides = array<i32>} : memref<16x32xf32, #tpu.memory_space<vmem>>, vector<2x32xf32>,
    %202 = vector.extract_strided_slice %199 {offsets = [0, 32], sizes = [2, 16], strides = [1, 1]} : vector<2x64xf32> to vector<2x16xf32>
    %203 = vector.extract_strided_slice %199 {offsets = [0, 48], sizes = [2, 16], strides = [1, 1]} : vector<2x64xf32> to vector<2x16xf32>
    %204 = tpu.concatenate %34, %203 in 1 : vector<2x16xf32>, vector<2x16xf32> -> vector<2x32xf32>
    %c0_37 = arith.constant 0 : index
    %c0_38 = arith.constant 0 : index
    %205 = vector.load %arg19[%c0_37, %c0_38] : memref<16x32xf32, #tpu.memory_space<vmem>>, vector<2x32xf32>
    tpu.vector_store %arg19[%c0_37, %c0_38], %204 {strides = array<i32>} : memref<16x32xf32, #tpu.memory_space<vmem>>, vector<2x32xf32>,
    %206 = tpu.concatenate %58, %179 in 1 : vector<2x16xf32>, vector<2x16xf32> -> vector<2x32xf32>
    %c2_39 = arith.constant 2 : index
    %c0_40 = arith.constant 0 : index
    %207 = vector.load %arg19[%c2_39, %c0_40] : memref<16x32xf32, #tpu.memory_space<vmem>>, vector<2x32xf32>
    tpu.vector_store %arg19[%c2_39, %c0_40], %206 {strides = array<i32>} : memref<16x32xf32, #tpu.memory_space<vmem>>, vector<2x32xf32>,
    %208 = tpu.concatenate %82, %155 in 1 : vector<2x16xf32>, vector<2x16xf32> -> vector<2x32xf32>
    %c4_41 = arith.constant 4 : index
    %c0_42 = arith.constant 0 : index
    %209 = vector.load %arg19[%c4_41, %c0_42] : memref<16x32xf32, #tpu.memory_space<vmem>>, vector<2x32xf32>
    tpu.vector_store %arg19[%c4_41, %c0_42], %208 {strides = array<i32>} : memref<16x32xf32, #tpu.memory_space<vmem>>, vector<2x32xf32>,
    %210 = tpu.concatenate %106, %131 in 1 : vector<2x16xf32>, vector<2x16xf32> -> vector<2x32xf32>
    %c6_43 = arith.constant 6 : index
    %c0_44 = arith.constant 0 : index
    %211 = vector.load %arg19[%c6_43, %c0_44] : memref<16x32xf32, #tpu.memory_space<vmem>>, vector<2x32xf32>
    tpu.vector_store %arg19[%c6_43, %c0_44], %210 {strides = array<i32>} : memref<16x32xf32, #tpu.memory_space<vmem>>, vector<2x32xf32>,
    %212 = tpu.concatenate %130, %107 in 1 : vector<2x16xf32>, vector<2x16xf32> -> vector<2x32xf32>
    %c8_45 = arith.constant 8 : index
    %c0_46 = arith.constant 0 : index
    %213 = vector.load %arg19[%c8_45, %c0_46] : memref<16x32xf32, #tpu.memory_space<vmem>>, vector<2x32xf32>
    tpu.vector_store %arg19[%c8_45, %c0_46], %212 {strides = array<i32>} : memref<16x32xf32, #tpu.memory_space<vmem>>, vector<2x32xf32>,
    %214 = tpu.concatenate %154, %83 in 1 : vector<2x16xf32>, vector<2x16xf32> -> vector<2x32xf32>
    %c10_47 = arith.constant 10 : index
    %c0_48 = arith.constant 0 : index
    %215 = vector.load %arg19[%c10_47, %c0_48] : memref<16x32xf32, #tpu.memory_space<vmem>>, vector<2x32xf32>
    tpu.vector_store %arg19[%c10_47, %c0_48], %214 {strides = array<i32>} : memref<16x32xf32, #tpu.memory_space<vmem>>, vector<2x32xf32>,
    %216 = tpu.concatenate %178, %59 in 1 : vector<2x16xf32>, vector<2x16xf32> -> vector<2x32xf32>
    %c12_49 = arith.constant 12 : index
    %c0_50 = arith.constant 0 : index
    %217 = vector.load %arg19[%c12_49, %c0_50] : memref<16x32xf32, #tpu.memory_space<vmem>>, vector<2x32xf32>
    tpu.vector_store %arg19[%c12_49, %c0_50], %216 {strides = array<i32>} : memref<16x32xf32, #tpu.memory_space<vmem>>, vector<2x32xf32>,
    %218 = tpu.concatenate %202, %35 in 1 : vector<2x16xf32>, vector<2x16xf32> -> vector<2x32xf32>
    %c14_51 = arith.constant 14 : index
    %c0_52 = arith.constant 0 : index
    %219 = vector.load %arg19[%c14_51, %c0_52] : memref<16x32xf32, #tpu.memory_space<vmem>>, vector<2x32xf32>
    tpu.vector_store %arg19[%c14_51, %c0_52], %218 {strides = array<i32>} : memref<16x32xf32, #tpu.memory_space<vmem>>, vector<2x32xf32>,
    %c0_53 = arith.constant 0 : index
    %c0_54 = arith.constant 0 : index
    %220 = vector.load %arg18[%c0_53, %c0_54] : memref<16x32xf32, #tpu.memory_space<vmem>>, vector<16x32xf32>
    %c0_55 = arith.constant 0 : index
    %c0_56 = arith.constant 0 : index
    %221 = vector.load %arg19[%c0_55, %c0_56] : memref<16x32xf32, #tpu.memory_space<vmem>>, vector<16x32xf32>
    %c0_57 = arith.constant 0 : index
    %c0_58 = arith.constant 0 : index
    %222 = vector.load %arg6[%c0_57, %c0_58] : memref<32x32xf32, #tpu.memory_space<vmem>>, vector<32x32xf32>
    %c0_59 = arith.constant 0 : index
    %c0_60 = arith.constant 0 : index
    %223 = vector.load %arg7[%c0_59, %c0_60] : memref<32x32xf32, #tpu.memory_space<vmem>>, vector<32x32xf32>
    %c0_61 = arith.constant 0 : index
    %c0_62 = arith.constant 0 : index
    %224 = vector.load %arg8[%c0_61, %c0_62] : memref<1x32xf32, #tpu.memory_space<vmem>>, vector<1x32xf32>
    %c0_63 = arith.constant 0 : index
    %c0_64 = arith.constant 0 : index
    %225 = vector.load %arg9[%c0_63, %c0_64] : memref<1x32xf32, #tpu.memory_space<vmem>>, vector<1x32xf32>
    %c0_65 = arith.constant 0 : index
    %c0_66 = arith.constant 0 : index
    %226 = vector.load %arg10[%c0_65, %c0_66] : memref<32x32xf32, #tpu.memory_space<vmem>>, vector<32x32xf32>
    %c0_67 = arith.constant 0 : index
    %c0_68 = arith.constant 0 : index
    %227 = vector.load %arg11[%c0_67, %c0_68] : memref<1x32xf32, #tpu.memory_space<vmem>>, vector<1x32xf32>
    %c0_69 = arith.constant 0 : index
    %c0_70 = arith.constant 0 : index
    %228 = vector.load %arg12[%c0_69, %c0_70] : memref<1x32xf32, #tpu.memory_space<vmem>>, vector<1x32xf32>
    %c0_71 = arith.constant 0 : index
    %c0_72 = arith.constant 0 : index
    %229 = vector.load %arg13[%c0_71, %c0_72] : memref<4x32xf32, #tpu.memory_space<vmem>>, vector<4x32xf32>
    %c0_73 = arith.constant 0 : index
    %c0_74 = arith.constant 0 : index
    %230 = vector.load %arg14[%c0_73, %c0_74] : memref<1x32xf32, #tpu.memory_space<vmem>>, vector<1x32xf32>
    %c0_75 = arith.constant 0 : index
    %c0_76 = arith.constant 0 : index
    %231 = vector.load %arg15[%c0_75, %c0_76] : memref<32x2xf32, #tpu.memory_space<vmem>>, vector<32x2xf32>
    %c0_77 = arith.constant 0 : index
    %c0_78 = arith.constant 0 : index
    %232 = vector.load %arg16[%c0_77, %c0_78] : memref<1x2xf32, #tpu.memory_space<vmem>>, vector<1x2xf32>
    %cst_79 = arith.constant dense<0.000000e+00> : vector<16x32xf32>
    %233 = tpu.matmul %220, %222, %cst_79 {dimension_numbers = #tpu.dot_dimension_numbers<[1], [0], [0], [1], [0, 0, 1, 1], [], []>} : vector<16x32xf32>, vector<32x32xf32>, vector<16x32xf32> -> vector<16x32xf32>
    %cst_80 = arith.constant dense<0.000000e+00> : vector<16x32xf32>
    %234 = tpu.matmul %221, %223, %cst_80 {dimension_numbers = #tpu.dot_dimension_numbers<[1], [0], [0], [1], [0, 0, 1, 1], [], []>} : vector<16x32xf32>, vector<32x32xf32>, vector<16x32xf32> -> vector<16x32xf32>
    %235 = arith.addf %233, %234 : vector<16x32xf32>
    %cst_81 = arith.constant 0.000000e+00 : f32
    %236 = vector.broadcast %cst_81 : f32 to vector<16x32xf32>
    %237 = arith.maximumf %235, %236 : vector<16x32xf32>
    %cst_82 = arith.constant dense<0.000000e+00> : vector<16xf32>
    %238 = vector.multi_reduction <add>, %237, %cst_82 [1] : vector<16x32xf32> to vector<16xf32>
    %239 = vector.shape_cast %238 : vector<16xf32> to vector<16x1xf32>
    %cst_83 = arith.constant 3.200000e+01 : f32
    %240 = vector.broadcast %cst_83 : f32 to vector<16x1xf32>
    %241 = arith.divf %239, %240 : vector<16x1xf32>
    %242 = vector.broadcast %241 : vector<16x1xf32> to vector<16x32xf32>
    %243 = arith.subf %237, %242 : vector<16x32xf32>
    %244 = arith.mulf %243, %243 : vector<16x32xf32>
    %cst_84 = arith.constant dense<0.000000e+00> : vector<16xf32>
    %245 = vector.multi_reduction <add>, %244, %cst_84 [1] : vector<16x32xf32> to vector<16xf32>
    %246 = vector.shape_cast %245 : vector<16xf32> to vector<16x1xf32>
    %cst_85 = arith.constant 3.200000e+01 : f32
    %247 = vector.broadcast %cst_85 : f32 to vector<16x1xf32>
    %248 = arith.divf %246, %247 : vector<16x1xf32>
    %cst_86 = arith.constant 9.99999974E-6 : f32
    %249 = vector.broadcast %cst_86 : f32 to vector<16x1xf32>
    %250 = arith.addf %248, %249 : vector<16x1xf32>
    %251 = math.rsqrt %250 : vector<16x1xf32>
    %252 = vector.broadcast %251 : vector<16x1xf32> to vector<16x32xf32>
    %253 = arith.mulf %243, %252 : vector<16x32xf32>
    %254 = vector.broadcast %224 : vector<1x32xf32> to vector<16x32xf32>
    %255 = arith.mulf %253, %254 : vector<16x32xf32>
    %256 = vector.broadcast %225 : vector<1x32xf32> to vector<16x32xf32>
    %257 = arith.addf %255, %256 : vector<16x32xf32>
    %cst_87 = arith.constant dense<0.000000e+00> : vector<16x32xf32>
    %258 = tpu.matmul %257, %226, %cst_87 {dimension_numbers = #tpu.dot_dimension_numbers<[1], [0], [0], [1], [0, 0, 1, 1], [], []>} : vector<16x32xf32>, vector<32x32xf32>, vector<16x32xf32> -> vector<16x32xf32>
    %cst_88 = arith.constant 0.000000e+00 : f32
    %259 = vector.broadcast %cst_88 : f32 to vector<16x32xf32>
    %260 = arith.maximumf %258, %259 : vector<16x32xf32>
    %cst_89 = arith.constant dense<0.000000e+00> : vector<16xf32>
    %261 = vector.multi_reduction <add>, %260, %cst_89 [1] : vector<16x32xf32> to vector<16xf32>
    %262 = vector.shape_cast %261 : vector<16xf32> to vector<16x1xf32>
    %cst_90 = arith.constant 3.200000e+01 : f32
    %263 = vector.broadcast %cst_90 : f32 to vector<16x1xf32>
    %264 = arith.divf %262, %263 : vector<16x1xf32>
    %265 = vector.broadcast %264 : vector<16x1xf32> to vector<16x32xf32>
    %266 = arith.subf %260, %265 : vector<16x32xf32>
    %267 = arith.mulf %266, %266 : vector<16x32xf32>
    %cst_91 = arith.constant dense<0.000000e+00> : vector<16xf32>
    %268 = vector.multi_reduction <add>, %267, %cst_91 [1] : vector<16x32xf32> to vector<16xf32>
    %269 = vector.shape_cast %268 : vector<16xf32> to vector<16x1xf32>
    %cst_92 = arith.constant 3.200000e+01 : f32
    %270 = vector.broadcast %cst_92 : f32 to vector<16x1xf32>
    %271 = arith.divf %269, %270 : vector<16x1xf32>
    %cst_93 = arith.constant 9.99999974E-6 : f32
    %272 = vector.broadcast %cst_93 : f32 to vector<16x1xf32>
    %273 = arith.addf %271, %272 : vector<16x1xf32>
    %274 = math.rsqrt %273 : vector<16x1xf32>
    %275 = vector.broadcast %274 : vector<16x1xf32> to vector<16x32xf32>
    %276 = arith.mulf %266, %275 : vector<16x32xf32>
    %277 = vector.broadcast %227 : vector<1x32xf32> to vector<16x32xf32>
    %278 = arith.mulf %276, %277 : vector<16x32xf32>
    %279 = vector.broadcast %228 : vector<1x32xf32> to vector<16x32xf32>
    %280 = arith.addf %278, %279 : vector<16x32xf32>
    %cst_94 = arith.constant dense<0.000000e+00> : vector<16x32xf32>
    %281 = tpu.matmul %0, %229, %cst_94 {dimension_numbers = #tpu.dot_dimension_numbers<[1], [0], [0], [1], [0, 0, 1, 1], [], []>} : vector<16x4xf32>, vector<4x32xf32>, vector<16x32xf32> -> vector<16x32xf32>
    %282 = arith.addf %280, %281 : vector<16x32xf32>
    %283 = vector.broadcast %230 : vector<1x32xf32> to vector<16x32xf32>
    %284 = arith.addf %282, %283 : vector<16x32xf32>
    %cst_95 = arith.constant dense<0.000000e+00> : vector<16x2xf32>
    %285 = tpu.matmul %284, %231, %cst_95 {dimension_numbers = #tpu.dot_dimension_numbers<[1], [0], [0], [1], [0, 0, 1, 1], [], []>} : vector<16x32xf32>, vector<32x2xf32>, vector<16x2xf32> -> vector<16x2xf32>
    %286 = vector.broadcast %232 : vector<1x2xf32> to vector<16x2xf32>
    %287 = arith.addf %285, %286 : vector<16x2xf32>
    %c0_96 = arith.constant 0 : index
    %c0_97 = arith.constant 0 : index
    %288 = vector.load %arg17[%c0_96, %c0_97] : memref<16x2xf32, #tpu.memory_space<vmem>>, vector<16x2xf32>
    tpu.vector_store %arg17[%c0_96, %c0_97], %287 {strides = array<i32>} : memref<16x2xf32, #tpu.memory_space<vmem>>, vector<16x2xf32>,
    return
  }
  func.func @transform_0(%arg0: i32) -> (i32, i32) {
    %c0_i32 = arith.constant 0 : i32
    %c0_i32_0 = arith.constant 0 : i32
    %c0_i32_1 = arith.constant 0 : i32
    return %c0_i32, %c0_i32_0 : i32, i32
  }
  func.func @transform_1(%arg0: i32) -> (i32, i32) {
    %c0_i32 = arith.constant 0 : i32
    %c0_i32_0 = arith.constant 0 : i32
    %c0_i32_1 = arith.constant 0 : i32
    return %c0_i32, %c0_i32_0 : i32, i32
  }
  func.func @transform_2(%arg0: i32) -> (i32, i32) {
    %c0_i32 = arith.constant 0 : i32
    %c0_i32_0 = arith.constant 0 : i32
    %c0_i32_1 = arith.constant 0 : i32
    return %c0_i32, %c0_i32_0 : i32, i32
  }
  func.func @transform_3(%arg0: i32) -> (i32, i32) {
    %c0_i32 = arith.constant 0 : i32
    %c0_i32_0 = arith.constant 0 : i32
    %c0_i32_1 = arith.constant 0 : i32
    return %c0_i32, %c0_i32_0 : i32, i32
  }
  func.func @transform_4(%arg0: i32) -> (i32, i32) {
    %c0_i32 = arith.constant 0 : i32
    %c0_i32_0 = arith.constant 0 : i32
    %c0_i32_1 = arith.constant 0 : i32
    return %c0_i32, %c0_i32_0 : i32, i32
  }
  func.func @transform_5(%arg0: i32) -> (i32, i32) {
    %c0_i32 = arith.constant 0 : i32
    %c0_i32_0 = arith.constant 0 : i32
    %c0_i32_1 = arith.constant 0 : i32
    return %c0_i32, %c0_i32_0 : i32, i32
  }
  func.func @transform_6(%arg0: i32) -> (i32, i32) {
    %c0_i32 = arith.constant 0 : i32
    %c0_i32_0 = arith.constant 0 : i32
    %c0_i32_1 = arith.constant 0 : i32
    return %c0_i32, %c0_i32_0 : i32, i32
  }
  func.func @transform_7(%arg0: i32) -> (i32, i32) {
    %c0_i32 = arith.constant 0 : i32
    %c0_i32_0 = arith.constant 0 : i32
    %c0_i32_1 = arith.constant 0 : i32
    return %c0_i32, %c0_i32_0 : i32, i32
  }
  func.func @transform_8(%arg0: i32) -> (i32, i32) {
    %c0_i32 = arith.constant 0 : i32
    %c0_i32_0 = arith.constant 0 : i32
    %c0_i32_1 = arith.constant 0 : i32
    return %c0_i32, %c0_i32_0 : i32, i32
  }
  func.func @transform_9(%arg0: i32) -> (i32, i32) {
    %c0_i32 = arith.constant 0 : i32
    %c0_i32_0 = arith.constant 0 : i32
    %c0_i32_1 = arith.constant 0 : i32
    return %c0_i32, %c0_i32_0 : i32, i32
  }
  func.func @transform_10(%arg0: i32) -> (i32, i32) {
    %c0_i32 = arith.constant 0 : i32
    %c0_i32_0 = arith.constant 0 : i32
    %c0_i32_1 = arith.constant 0 : i32
    return %c0_i32, %c0_i32_0 : i32, i32
  }
  func.func @transform_11(%arg0: i32) -> (i32, i32) {
    %c0_i32 = arith.constant 0 : i32
    %c0_i32_0 = arith.constant 0 : i32
    %c0_i32_1 = arith.constant 0 : i32
    return %c0_i32, %c0_i32_0 : i32, i32
  }
  func.func @transform_12(%arg0: i32) -> (i32, i32) {
    %c0_i32 = arith.constant 0 : i32
    %c0_i32_0 = arith.constant 0 : i32
    %c0_i32_1 = arith.constant 0 : i32
    return %c0_i32, %c0_i32_0 : i32, i32
  }
  func.func @transform_13(%arg0: i32) -> (i32, i32) {
    %c0_i32 = arith.constant 0 : i32
    %c0_i32_0 = arith.constant 0 : i32
    %c0_i32_1 = arith.constant 0 : i32
    return %c0_i32, %c0_i32_0 : i32, i32
  }
  func.func @transform_14(%arg0: i32) -> (i32, i32) {
    %c0_i32 = arith.constant 0 : i32
    %c0_i32_0 = arith.constant 0 : i32
    %c0_i32_1 = arith.constant 0 : i32
    return %c0_i32, %c0_i32_0 : i32, i32
  }
  func.func @transform_15(%arg0: i32) -> (i32, i32) {
    %c0_i32 = arith.constant 0 : i32
    %c0_i32_0 = arith.constant 0 : i32
    %c0_i32_1 = arith.constant 0 : i32
    return %c0_i32, %c0_i32_0 : i32, i32
  }
  func.func @transform_16(%arg0: i32) -> (i32, i32) {
    %c0_i32 = arith.constant 0 : i32
    %c0_i32_0 = arith.constant 0 : i32
    %c0_i32_1 = arith.constant 0 : i32
    return %c0_i32, %c0_i32_0 : i32, i32
  }
}

</mosaic_0001>

<llo_original>
// kernel: lstm_model_forward.1
$region0: #{lstm_model_forward.1}
  #allocation0 [shape = 'u32[]', space=smem, size = 0x4, offset = 0x4, fixed_abs, tag = 'smem constant byte address 0x4 - core index']
  #allocation1 [shape = 'u32[144,128]{1,0:T(1,128)}', space=vmem, size = 0x12000, scoped, tag = 'internal scratch']
  #allocation2 [shape = 'f32[16,32]{1,0:T(8,128)}', space=vmem, size = 0x2000, scoped, tag = 'scratch operand']
  #allocation3 [shape = 'f32[16,32]{1,0:T(8,128)}', space=vmem, size = 0x2000, scoped, tag = 'scratch operand']
  %s0 = inlined_call_operand.vmem [shape: f32[16,4], index: 0, kind: input, shape index: {}]
  %s1 = inlined_call_operand.vmem [shape: f32[8,256], index: 1, kind: input, shape index: {}]
  %s2 = inlined_call_operand.vmem [shape: f32[4,256], index: 2, kind: input, shape index: {}]
  %s3 = inlined_call_operand.vmem [shape: f32[1,256], index: 3, kind: input, shape index: {}]
  %s4 = inlined_call_operand.hbm [shape: f32[64,256], index: 4, kind: input, shape index: {}]
  %s5 = inlined_call_operand.vmem [shape: f32[32,32], index: 5, kind: input, shape index: {}]
  %s6 = inlined_call_operand.vmem [shape: f32[32,32], index: 6, kind: input, shape index: {}]
  %s7 = inlined_call_operand.vmem [shape: f32[1,32], index: 7, kind: input, shape index: {}]
  %s8 = inlined_call_operand.vmem [shape: f32[1,32], index: 8, kind: input, shape index: {}]
  %s9 = inlined_call_operand.hbm [shape: f32[32,32], index: 9, kind: input, shape index: {}]
  %s10 = inlined_call_operand.vmem [shape: f32[1,32], index: 10, kind: input, shape index: {}]
  %s11 = inlined_call_operand.vmem [shape: f32[1,32], index: 11, kind: input, shape index: {}]
  %s12 = inlined_call_operand.vmem [shape: f32[4,32], index: 12, kind: input, shape index: {}]
  %s13 = inlined_call_operand.hbm [shape: f32[1,32], index: 13, kind: input, shape index: {}]
  %s14 = inlined_call_operand.vmem [shape: f32[32,2], index: 14, kind: input, shape index: {}]
  %s15 = inlined_call_operand.hbm [shape: f32[1,2], index: 15, kind: input, shape index: {}]
  %s16 = inlined_call_operand.vmem [shape: f32[16,2], index: 16, kind: output, shape index: {}]
  %s17 = sld [smem:[#allocation0]]
  $region90: #{lstm_model_forward.1} parent=0
    _
  %s19 = ssub.s32 1, %s17
  %s20 = scalar_select 0, %s19, %s17
  $region1: #{lstm_model_forward.1} parent=0
    #allocation4 [shape = 'u8[65536]{0}', space=vmem, size = 0x10000, scoped, tag = 'input window, operand 4, single buffered']
    #allocation5 [shape = 's32[1]{0}', space=sflag, size = 0x4, scoped, tag = 'scoped memory for lstm_model_forward.1']
    #allocation6 [shape = 'u8[16384]{0}', space=vmem, size = 0x4000, scoped, tag = 'input window, operand 9, single buffered']
    #allocation7 [shape = 's32[1]{0}', space=sflag, size = 0x4, scoped, tag = 'scoped memory for lstm_model_forward.1']
    #allocation8 [shape = 'u8[512]{0}', space=vmem, size = 0x400, scoped, tag = 'input window, operand 13, single buffered']
    #allocation9 [shape = 'u8[512]{0}', space=vmem, size = 0x400, scoped, tag = 'input window, operand 15, single buffered']
    #allocation10 [shape = 's32[1]{0}', space=sflag, size = 0x4, scoped, tag = 'scoped memory for lstm_model_forward.1']
    %21 = vsyncpa [#allocation5], 0
    %22 = vsyncpa [#allocation7], 0
    %23 = vsyncpa [#allocation10], 0
    // Predicated region
    $region2: #{lstm_model_forward.1} parent=1 // pred_check
      _
    $region3: #{lstm_model_forward.1} parent=1 // pred_check_branch
      %25 = sbr.rel (0) target = $region5
    $region4: #{lstm_model_forward.1} parent=1 // pred_region
      _
    $region5: #{lstm_model_forward.1} parent=1 // pred_fallthru
      _
    // Predicated region
    $region6: #{lstm_model_forward.1} parent=1 // pred_check
      _
    $region7: #{lstm_model_forward.1} parent=1 // pred_check_branch
      %27 = sbr.rel (0) target = $region9
    $region8: #{lstm_model_forward.1} parent=1 // pred_region
      _
    $region9: #{lstm_model_forward.1} parent=1 // pred_fallthru
      _
    // Predicated region
    $region10: #{lstm_model_forward.1} parent=1 // pred_check
      _
    $region11: #{lstm_model_forward.1} parent=1 // pred_check_branch
      %29 = sbr.rel (0) target = $region13
    $region12: #{lstm_model_forward.1} parent=1 // pred_region
      _
    $region13: #{lstm_model_forward.1} parent=1 // pred_fallthru
      _
    // Predicated region
    $region14: #{lstm_model_forward.1} parent=1 // pred_check
      _
    $region15: #{lstm_model_forward.1} parent=1 // pred_check_branch
      %31 = sbr.rel (0) target = $region17
    $region16: #{lstm_model_forward.1} parent=1 // pred_region
      _
    $region17: #{lstm_model_forward.1} parent=1 // pred_fallthru
      _
    // Predicated region
    $region18: #{lstm_model_forward.1} parent=1 // pred_check
      _
    $region19: #{lstm_model_forward.1} parent=1 // pred_check_branch
      %33 = sbr.rel (0) target = $region21
    $region20: #{lstm_model_forward.1} parent=1 // pred_region
      %s35 = ssub.s32 2048, 2048
      %36 = vsyncadd [#allocation5], %s35
      %s37 = sshll.u32 [#allocation4], 4
      %s38 = int_to_ptr.vmem [resolvable:$true] %s37
      %43 = dma.hbm_to_vmem [thread:$0]  %s4, 2048, %s38, [#allocation5], 256, 256, 16
    $region21: #{lstm_model_forward.1} parent=1 // pred_fallthru
      _
    // Predicated region
    $region22: #{lstm_model_forward.1} parent=1 // pred_check
      _
    $region23: #{lstm_model_forward.1} parent=1 // pred_check_branch
      %45 = sbr.rel (0) target = $region25
    $region24: #{lstm_model_forward.1} parent=1 // pred_region
      _
    $region25: #{lstm_model_forward.1} parent=1 // pred_fallthru
      _
    // Predicated region
    $region26: #{lstm_model_forward.1} parent=1 // pred_check
      _
    $region27: #{lstm_model_forward.1} parent=1 // pred_check_branch
      %47 = sbr.rel (0) target = $region29
    $region28: #{lstm_model_forward.1} parent=1 // pred_region
      _
    $region29: #{lstm_model_forward.1} parent=1 // pred_fallthru
      _
    // Predicated region
    $region30: #{lstm_model_forward.1} parent=1 // pred_check
      _
    $region31: #{lstm_model_forward.1} parent=1 // pred_check_branch
      %49 = sbr.rel (0) target = $region33
    $region32: #{lstm_model_forward.1} parent=1 // pred_region
      _
    $region33: #{lstm_model_forward.1} parent=1 // pred_fallthru
      _
    // Predicated region
    $region34: #{lstm_model_forward.1} parent=1 // pred_check
      _
    $region35: #{lstm_model_forward.1} parent=1 // pred_check_branch
      %51 = sbr.rel (0) target = $region37
    $region36: #{lstm_model_forward.1} parent=1 // pred_region
      _
    $region37: #{lstm_model_forward.1} parent=1 // pred_fallthru
      _
    // Predicated region
    $region38: #{lstm_model_forward.1} parent=1 // pred_check
      _
    $region39: #{lstm_model_forward.1} parent=1 // pred_check_branch
      %53 = sbr.rel (0) target = $region41
    $region40: #{lstm_model_forward.1} parent=1 // pred_region
      %s55 = ssub.s32 512, 512
      %56 = vsyncadd [#allocation7], %s55
      %s57 = sshll.u32 [#allocation6], 4
      %s58 = int_to_ptr.vmem [resolvable:$true] %s57
      %63 = dma.hbm_to_vmem [thread:$0]  %s9, 512, %s58, [#allocation7], 128, 128, 8
    $region41: #{lstm_model_forward.1} parent=1 // pred_fallthru
      _
    // Predicated region
    $region42: #{lstm_model_forward.1} parent=1 // pred_check
      _
    $region43: #{lstm_model_forward.1} parent=1 // pred_check_branch
      %65 = sbr.rel (0) target = $region45
    $region44: #{lstm_model_forward.1} parent=1 // pred_region
      _
    $region45: #{lstm_model_forward.1} parent=1 // pred_fallthru
      _
    // Predicated region
    $region46: #{lstm_model_forward.1} parent=1 // pred_check
      _
    $region47: #{lstm_model_forward.1} parent=1 // pred_check_branch
      %67 = sbr.rel (0) target = $region49
    $region48: #{lstm_model_forward.1} parent=1 // pred_region
      _
    $region49: #{lstm_model_forward.1} parent=1 // pred_fallthru
      _
    // Predicated region
    $region50: #{lstm_model_forward.1} parent=1 // pred_check
      _
    $region51: #{lstm_model_forward.1} parent=1 // pred_check_branch
      %69 = sbr.rel (0) target = $region53
    $region52: #{lstm_model_forward.1} parent=1 // pred_region
      _
    $region53: #{lstm_model_forward.1} parent=1 // pred_fallthru
      _
    // Predicated region
    $region54: #{lstm_model_forward.1} parent=1 // pred_check
      _
    $region55: #{lstm_model_forward.1} parent=1 // pred_check_branch
      %71 = sbr.rel (0) target = $region57
    $region56: #{lstm_model_forward.1} parent=1 // pred_region
      %s73 = ssub.s32 16, 16
      %74 = vsyncadd [#allocation7], %s73
      %s76 = sshll.u32 [#allocation8], 4
      %s77 = int_to_ptr.vmem [resolvable:$true] %s76
      %79 = dma.hbm_to_vmem [thread:$0]  %s13, 16, %s77, [#allocation7]
    $region57: #{lstm_model_forward.1} parent=1 // pred_fallthru
      _
    // Predicated region
    $region58: #{lstm_model_forward.1} parent=1 // pred_check
      _
    $region59: #{lstm_model_forward.1} parent=1 // pred_check_branch
      %81 = sbr.rel (0) target = $region61
    $region60: #{lstm_model_forward.1} parent=1 // pred_region
      _
    $region61: #{lstm_model_forward.1} parent=1 // pred_fallthru
      _
    // Predicated region
    $region62: #{lstm_model_forward.1} parent=1 // pred_check
      _
    $region63: #{lstm_model_forward.1} parent=1 // pred_check_branch
      %83 = sbr.rel (0) target = $region65
    $region64: #{lstm_model_forward.1} parent=1 // pred_region
      %s85 = ssub.s32 16, 16
      %86 = vsyncadd [#allocation10], %s85
      %s88 = sshll.u32 [#allocation9], 4
      %s89 = int_to_ptr.vmem [resolvable:$true] %s88
      %91 = dma.hbm_to_vmem [thread:$0]  %s15, 16, %s89, [#allocation10]
    $region65: #{lstm_model_forward.1} parent=1 // pred_fallthru
      _
    // Predicated region
    $region66: #{lstm_model_forward.1} parent=1 // pred_check
      _
    $region67: #{lstm_model_forward.1} parent=1 // pred_check_branch
      %93 = sbr.rel (0) target = $region69
    $region68: #{lstm_model_forward.1} parent=1 // pred_region
      %94 = dma.done [#allocation5], 2048
    $region69: #{lstm_model_forward.1} parent=1 // pred_fallthru
      _
    // Predicated region
    $region70: #{lstm_model_forward.1} parent=1 // pred_check
      _
    $region71: #{lstm_model_forward.1} parent=1 // pred_check_branch
      %96 = sbr.rel (0) target = $region73
    $region72: #{lstm_model_forward.1} parent=1 // pred_region
      %97 = dma.done [#allocation7], 512
    $region73: #{lstm_model_forward.1} parent=1 // pred_fallthru
      _
    // Predicated region
    $region74: #{lstm_model_forward.1} parent=1 // pred_check
      _
    $region75: #{lstm_model_forward.1} parent=1 // pred_check_branch
      %99 = sbr.rel (0) target = $region77
    $region76: #{lstm_model_forward.1} parent=1 // pred_region
      %100 = dma.done [#allocation7], 16
    $region77: #{lstm_model_forward.1} parent=1 // pred_fallthru
      _
    // Predicated region
    $region78: #{lstm_model_forward.1} parent=1 // pred_check
      _
    $region79: #{lstm_model_forward.1} parent=1 // pred_check_branch
      %102 = sbr.rel (0) target = $region81
    $region80: #{lstm_model_forward.1} parent=1 // pred_region
      %103 = dma.done [#allocation10], 16
    $region81: #{lstm_model_forward.1} parent=1 // pred_fallthru
      _
    %v104 = vld [vmem:[%s0] sm:$0xff]
    %v105 = vld [vmem:[%s0 + $0x8] sm:$0xff]
    %108 = vrot.lane.b32.xlu0 %v104, 4
    %v109 = vpop.permute.xlu0 %108
    %110 = vrot.lane.b32.xlu0 %v105, 4
    %v111 = vpop.permute.xlu0 %110
    %vm114 = vcmask 31744
    %v115 = vsel %vm114, %v104, %v109
    %v116 = vsel %vm114, %v105, %v111
    %v117 = vld [vmem:[%s1] sm:$0xff]
    %v118 = vld [vmem:[%s1 + $0x8] sm:$0xff]
    %v119 = vld [vmem:[%s3] sm:$0x3]
    %v121 = vlaneseq
    %v122 = vshrl.u32 %v121, 7
    %v123 = vsub.s32 0, %v122
    %v124 = vrot.slane %v119, %v123
    %v125 = vlaneseq
    %v126 = vshrl.u32 %v125, 7
    %v127 = vsub.s32 1, %v126
    %v128 = vrot.slane %v119, %v127
    %vm131 = vcmask 64512
    %v133 = vsel %vm131, %v115, 0
    %v136 = vsel %vm131, %v116, 0
    %138 = vmatprep.subr.mxu0 %v118
    %139 = vmatpush1.msra.mxu0 %v117
    %140 = vmatprep.subr.mxu0 0.0
    %141 = vmatpush1.msra.mxu0 0.0
    %142 = vmatprep.subr.mxu0 0.0
    %143 = vmatpush1.msra.mxu0 0.0
    %144 = vmatprep.subr.mxu0 0.0
    %145 = vmatpush1.msra.mxu0 0.0
    %146 = vmatprep.subr.mxu0 0.0
    %147 = vmatpush1.msra.mxu0 0.0
    %148 = vmatprep.subr.mxu0 0.0
    %149 = vmatpush1.msra.mxu0 0.0
    %150 = vmatprep.subr.mxu0 0.0
    %151 = vmatpush1.msra.mxu0 0.0
    %152 = vmatprep.subr.mxu0 0.0
    %153 = vmatpush1.msra.mxu0 0.0
    %154 = vmatprep.subr.mxu0 0.0
    %155 = vmatpush1.msra.mxu0 0.0
    %156 = vmatprep.subr.mxu0 0.0
    %157 = vmatpush1.msra.mxu0 0.0
    %158 = vmatprep.subr.mxu0 0.0
    %159 = vmatpush1.msra.mxu0 0.0
    %160 = vmatprep.subr.mxu0 0.0
    %161 = vmatpush1.msra.mxu0 0.0
    %162 = vmatprep.subr.mxu0 0.0
    %163 = vmatpush1.msra.mxu0 0.0
    %164 = vmatprep.subr.mxu0 0.0
    %165 = vmatpush1.msra.mxu0 0.0
    %166 = vmatprep.subr.mxu0 0.0
    %167 = vmatpush1.msra.mxu0 0.0
    %168 = vmatprep.subr.mxu0 0.0
    %169 = vmatpush1.msra.mxu0 0.0
    %170 = vmatprep.subr.mxu0 0.0
    %171 = vmatpush1.msra.mxu0 0.0
    %172 = vmatprep.subr.mxu0 0.0
    %173 = vmatpush1.msra.mxu0 0.0
    %174 = vmatprep.subr.mxu0 0.0
    %175 = vmatpush1.msra.mxu0 0.0
    %176 = vmatprep.subr.mxu0 0.0
    %177 = vmatpush1.msra.mxu0 0.0
    %178 = vmatprep.subr.mxu0 0.0
    %179 = vmatpush1.msra.mxu0 0.0
    %180 = vmatprep.subr.mxu0 0.0
    %181 = vmatpush1.msra.mxu0 0.0
    %182 = vmatprep.subr.mxu0 0.0
    %183 = vmatpush1.msra.mxu0 0.0
    %184 = vmatprep.subr.mxu0 0.0
    %185 = vmatpush1.msra.mxu0 0.0
    %186 = vmatprep.subr.mxu0 0.0
    %187 = vmatpush1.msra.mxu0 0.0
    %188 = vmatprep.subr.mxu0 0.0
    %189 = vmatpush1.msra.mxu0 0.0
    %190 = vmatprep.subr.mxu0 0.0
    %191 = vmatpush1.msra.mxu0 0.0
    %192 = vmatprep.subr.mxu0 0.0
    %193 = vmatpush1.msra.mxu0 0.0
    %194 = vmatprep.subr.mxu0 0.0
    %195 = vmatpush1.msra.mxu0 0.0
    %196 = vmatprep.subr.mxu0 0.0
    %197 = vmatpush1.msra.mxu0 0.0
    %198 = vmatprep.subr.mxu0 0.0
    %199 = vmatpush1.msra.mxu0 0.0
    %200 = vmatprep.subr.mxu0 0.0
    %201 = vmatpush1.msra.mxu0 0.0
    %202 = vmatprep.mubr.f32.mxu0 0.0
    %203 = vmatmul.mubr.f32.gmra.mrb[0].mxu0 %v133
    %v204 = vpop.f32.mrb[0].mxu0
    %v205 = vadd.f32 %v124, %v204
    %v206 = vpop.f32.mrb[0].mxu0
    %v207 = vadd.f32 %v128, %v206
    %208 = vmatprep.mubr.f32.mxu0 0.0
    %209 = vmatmul.mubr.f32.gmra.mrb[0].mxu0 %v136
    %v210 = vpop.f32.mrb[0].mxu0
    %v211 = vadd.f32 %v124, %v210
    %v212 = vpop.f32.mrb[0].mxu0
    %v213 = vadd.f32 %v128, %v212
    %214 = vdwg.mxu0
    %v215 = vld [vmem:[%s2] sm:$0xff]
    %v217 = vcombine.high %v215, %v215
    %v218 = vsel %vm114, %v104, 0
    %v220 = vsel %vm114, %v105, 0
    %vm222 = vcmask 1043456
    %v223 = vsel %vm222, %v215, 0
    %v225 = vsel %vm222, %v217, 0
    %227 = vmatprep.subr.mxu0 %v225
    %228 = vmatpush1.msra.mxu0 %v223
    %229 = vmatprep.subr.mxu0 0.0
    %230 = vmatpush1.msra.mxu0 0.0
    %231 = vmatprep.subr.mxu0 0.0
    %232 = vmatpush1.msra.mxu0 0.0
    %233 = vmatprep.subr.mxu0 0.0
    %234 = vmatpush1.msra.mxu0 0.0
    %235 = vmatprep.subr.mxu0 0.0
    %236 = vmatpush1.msra.mxu0 0.0
    %237 = vmatprep.subr.mxu0 0.0
    %238 = vmatpush1.msra.mxu0 0.0
    %239 = vmatprep.subr.mxu0 0.0
    %240 = vmatpush1.msra.mxu0 0.0
    %241 = vmatprep.subr.mxu0 0.0
    %242 = vmatpush1.msra.mxu0 0.0
    %243 = vmatprep.subr.mxu0 0.0
    %244 = vmatpush1.msra.mxu0 0.0
    %245 = vmatprep.subr.mxu0 0.0
    %246 = vmatpush1.msra.mxu0 0.0
    %247 = vmatprep.subr.mxu0 0.0
    %248 = vmatpush1.msra.mxu0 0.0
    %249 = vmatprep.subr.mxu0 0.0
    %250 = vmatpush1.msra.mxu0 0.0
    %251 = vmatprep.subr.mxu0 0.0
    %252 = vmatpush1.msra.mxu0 0.0
    %253 = vmatprep.subr.mxu0 0.0
    %254 = vmatpush1.msra.mxu0 0.0
    %255 = vmatprep.subr.mxu0 0.0
    %256 = vmatpush1.msra.mxu0 0.0
    %257 = vmatprep.subr.mxu0 0.0
    %258 = vmatpush1.msra.mxu0 0.0
    %259 = vmatprep.subr.mxu0 0.0
    %260 = vmatpush1.msra.mxu0 0.0
    %261 = vmatprep.subr.mxu0 0.0
    %262 = vmatpush1.msra.mxu0 0.0
    %263 = vmatprep.subr.mxu0 0.0
    %264 = vmatpush1.msra.mxu0 0.0
    %265 = vmatprep.subr.mxu0 0.0
    %266 = vmatpush1.msra.mxu0 0.0
    %267 = vmatprep.subr.mxu0 0.0
    %268 = vmatpush1.msra.mxu0 0.0
    %269 = vmatprep.subr.mxu0 0.0
    %270 = vmatpush1.msra.mxu0 0.0
    %271 = vmatprep.subr.mxu0 0.0
    %272 = vmatpush1.msra.mxu0 0.0
    %273 = vmatprep.subr.mxu0 0.0
    %274 = vmatpush1.msra.mxu0 0.0
    %275 = vmatprep.subr.mxu0 0.0
    %276 = vmatpush1.msra.mxu0 0.0
    %277 = vmatprep.subr.mxu0 0.0
    %278 = vmatpush1.msra.mxu0 0.0
    %279 = vmatprep.subr.mxu0 0.0
    %280 = vmatpush1.msra.mxu0 0.0
    %281 = vmatprep.subr.mxu0 0.0
    %282 = vmatpush1.msra.mxu0 0.0
    %283 = vmatprep.subr.mxu0 0.0
    %284 = vmatpush1.msra.mxu0 0.0
    %285 = vmatprep.subr.mxu0 0.0
    %286 = vmatpush1.msra.mxu0 0.0
    %287 = vmatprep.subr.mxu0 0.0
    %288 = vmatpush1.msra.mxu0 0.0
    %289 = vmatprep.subr.mxu0 0.0
    %290 = vmatpush1.msra.mxu0 0.0
    %291 = vmatprep.mubr.f32.mxu0 0.0
    %292 = vmatmul.mubr.f32.gmra.mrb[0].mxu0 %v218
    %v293 = vpop.f32.mrb[0].mxu0
    %v294 = vadd.f32 0.0, %v293
    %v295 = vpop.f32.mrb[0].mxu0
    %v296 = vadd.f32 0.0, %v295
    %297 = vmatprep.mubr.f32.mxu0 0.0
    %298 = vmatmul.mubr.f32.gmra.mrb[0].mxu0 %v220
    %v299 = vpop.f32.mrb[0].mxu0
    %v300 = vadd.f32 0.0, %v299
    %v301 = vpop.f32.mrb[0].mxu0
    %v302 = vadd.f32 0.0, %v301
    %303 = vdwg.mxu0
    %v304 = vld [vmem:[#allocation4] sm:$0xff]
    %v305 = vld [vmem:[#allocation4 + $0x8] sm:$0xff]
    %v306 = vld [vmem:[#allocation4 + $0x10] sm:$0xff]
    %v307 = vld [vmem:[#allocation4 + $0x18] sm:$0xff]
    %v308 = vld [vmem:[#allocation4 + $0x20] sm:$0xff]
    %v309 = vld [vmem:[#allocation4 + $0x28] sm:$0xff]
    %v310 = vld [vmem:[#allocation4 + $0x30] sm:$0xff]
    %v311 = vld [vmem:[#allocation4 + $0x38] sm:$0xff]
    %v312 = vld [vmem:[#allocation4 + $0x40] sm:$0xff]
    %v313 = vld [vmem:[#allocation4 + $0x48] sm:$0xff]
    %v314 = vld [vmem:[#allocation4 + $0x50] sm:$0xff]
    %v315 = vld [vmem:[#allocation4 + $0x58] sm:$0xff]
    %v316 = vld [vmem:[#allocation4 + $0x60] sm:$0xff]
    %v317 = vld [vmem:[#allocation4 + $0x68] sm:$0xff]
    %v318 = vld [vmem:[#allocation4 + $0x70] sm:$0xff]
    %v319 = vld [vmem:[#allocation4 + $0x78] sm:$0xff]
    %v322 = vrot.slane %v300, 6
    %v323 = vrot.slane %v302, 6
    %v326 = vadd.f32 %v205, %v322
    %v327 = vadd.f32 %v207, %v323
    %vm328 = vcmask 523264
    %v330 = vsel %vm328, 0.0, 0
    %332 = vmatprep.subr.mxu0 %v305
    %333 = vmatpush1.msra.mxu0 %v304
    %334 = vmatprep.subr.mxu0 %v307
    %335 = vmatpush1.msra.mxu0 %v306
    %336 = vmatprep.subr.mxu0 %v309
    %337 = vmatpush1.msra.mxu0 %v308
    %338 = vmatprep.subr.mxu0 %v311
    %339 = vmatpush1.msra.mxu0 %v310
    %340 = vmatprep.subr.mxu0 %v313
    %341 = vmatpush1.msra.mxu0 %v312
    %342 = vmatprep.subr.mxu0 %v315
    %343 = vmatpush1.msra.mxu0 %v314
    %344 = vmatprep.subr.mxu0 %v317
    %345 = vmatpush1.msra.mxu0 %v316
    %346 = vmatprep.subr.mxu0 %v319
    %347 = vmatpush1.msra.mxu0 %v318
    %348 = vmatprep.subr.mxu0 0.0
    %349 = vmatpush1.msra.mxu0 0.0
    %350 = vmatprep.subr.mxu0 0.0
    %351 = vmatpush1.msra.mxu0 0.0
    %352 = vmatprep.subr.mxu0 0.0
    %353 = vmatpush1.msra.mxu0 0.0
    %354 = vmatprep.subr.mxu0 0.0
    %355 = vmatpush1.msra.mxu0 0.0
    %356 = vmatprep.subr.mxu0 0.0
    %357 = vmatpush1.msra.mxu0 0.0
    %358 = vmatprep.subr.mxu0 0.0
    %359 = vmatpush1.msra.mxu0 0.0
    %360 = vmatprep.subr.mxu0 0.0
    %361 = vmatpush1.msra.mxu0 0.0
    %362 = vmatprep.subr.mxu0 0.0
    %363 = vmatpush1.msra.mxu0 0.0
    %364 = vmatprep.subr.mxu0 0.0
    %365 = vmatpush1.msra.mxu0 0.0
    %366 = vmatprep.subr.mxu0 0.0
    %367 = vmatpush1.msra.mxu0 0.0
    %368 = vmatprep.subr.mxu0 0.0
    %369 = vmatpush1.msra.mxu0 0.0
    %370 = vmatprep.subr.mxu0 0.0
    %371 = vmatpush1.msra.mxu0 0.0
    %372 = vmatprep.subr.mxu0 0.0
    %373 = vmatpush1.msra.mxu0 0.0
    %374 = vmatprep.subr.mxu0 0.0
    %375 = vmatpush1.msra.mxu0 0.0
    %376 = vmatprep.subr.mxu0 0.0
    %377 = vmatpush1.msra.mxu0 0.0
    %378 = vmatprep.subr.mxu0 0.0
    %379 = vmatpush1.msra.mxu0 0.0
    %380 = vmatprep.subr.mxu0 0.0
    %381 = vmatpush1.msra.mxu0 0.0
    %382 = vmatprep.subr.mxu0 0.0
    %383 = vmatpush1.msra.mxu0 0.0
    %384 = vmatprep.subr.mxu0 0.0
    %385 = vmatpush1.msra.mxu0 0.0
    %386 = vmatprep.subr.mxu0 0.0
    %387 = vmatpush1.msra.mxu0 0.0
    %388 = vmatprep.subr.mxu0 0.0
    %389 = vmatpush1.msra.mxu0 0.0
    %390 = vmatprep.subr.mxu0 0.0
    %391 = vmatpush1.msra.mxu0 0.0
    %392 = vmatprep.subr.mxu0 0.0
    %393 = vmatpush1.msra.mxu0 0.0
    %394 = vmatprep.subr.mxu0 0.0
    %395 = vmatpush1.msra.mxu0 0.0
    %396 = vmatprep.mubr.f32.mxu0 0.0
    %397 = vmatmul.mubr.f32.gmra.mrb[0].mxu0 %v330
    %v398 = vpop.f32.mrb[0].mxu0
    %v399 = vadd.f32 0.0, %v398
    %v400 = vpop.f32.mrb[0].mxu0
    %v401 = vadd.f32 0.0, %v400
    %402 = vdwg.mxu0
    %v403 = vadd.f32 %v326, %v399
    %v404 = vadd.f32 %v327, %v401
    %v405 = vxor.u32 %v403, 2147483648
    %v406 = vxor.u32 %v404, 2147483648
    %v407 = vmul.f32 %v405, 1.442695
    %v408 = vpow.pop %v407
    %v409 = vmul.f32 %v406, 1.442695
    %v410 = vpow.pop %v409
    %v411 = vadd.f32 %v408, 1.0
    %v412 = vadd.f32 %v410, 1.0
    %v413 = vrcp.pop %v411
    %v414 = vmul.f32 1.0, %v413
    %v415 = vrcp.pop %v412
    %v416 = vmul.f32 1.0, %v415
    %v417 = vtanh.pop %v404
    %v418 = vmul.f32 %v414, 0.0
    %v419 = vmul.f32 %v414, %v417
    %421 = vrot.lane.b32.xlu0 %v419, 64
    %v422 = vpop.permute.xlu0 %421
    %v424 = vadd.f32 %v418, %v422
    %v425 = vtanh.pop %v424
    %v426 = vmul.f32 %v416, %v425
    %428 = vrot.lane.b32.xlu0 %v426, 64
    %v429 = vpop.permute.xlu0 %428
    %vm431 = vcmask 254976
    %432 = vst.msk [vmem:[#allocation2] sm:$0x3] %vm431, %v429
    %v433 = vrot.slane %v300, 2
    %v434 = vrot.slane %v302, 2
    %v437 = vadd.f32 %v205, %v433
    %v438 = vadd.f32 %v207, %v434
    %v439 = vsel %vm328, %v429, 0
    %441 = vmatprep.subr.mxu0 %v305
    %442 = vmatpush1.msra.mxu0 %v304
    %443 = vmatprep.subr.mxu0 %v307
    %444 = vmatpush1.msra.mxu0 %v306
    %445 = vmatprep.subr.mxu0 %v309
    %446 = vmatpush1.msra.mxu0 %v308
    %447 = vmatprep.subr.mxu0 %v311
    %448 = vmatpush1.msra.mxu0 %v310
    %449 = vmatprep.subr.mxu0 %v313
    %450 = vmatpush1.msra.mxu0 %v312
    %451 = vmatprep.subr.mxu0 %v315
    %452 = vmatpush1.msra.mxu0 %v314
    %453 = vmatprep.subr.mxu0 %v317
    %454 = vmatpush1.msra.mxu0 %v316
    %455 = vmatprep.subr.mxu0 %v319
    %456 = vmatpush1.msra.mxu0 %v318
    %457 = vmatprep.subr.mxu0 0.0
    %458 = vmatpush1.msra.mxu0 0.0
    %459 = vmatprep.subr.mxu0 0.0
    %460 = vmatpush1.msra.mxu0 0.0
    %461 = vmatprep.subr.mxu0 0.0
    %462 = vmatpush1.msra.mxu0 0.0
    %463 = vmatprep.subr.mxu0 0.0
    %464 = vmatpush1.msra.mxu0 0.0
    %465 = vmatprep.subr.mxu0 0.0
    %466 = vmatpush1.msra.mxu0 0.0
    %467 = vmatprep.subr.mxu0 0.0
    %468 = vmatpush1.msra.mxu0 0.0
    %469 = vmatprep.subr.mxu0 0.0
    %470 = vmatpush1.msra.mxu0 0.0
    %471 = vmatprep.subr.mxu0 0.0
    %472 = vmatpush1.msra.mxu0 0.0
    %473 = vmatprep.subr.mxu0 0.0
    %474 = vmatpush1.msra.mxu0 0.0
    %475 = vmatprep.subr.mxu0 0.0
    %476 = vmatpush1.msra.mxu0 0.0
    %477 = vmatprep.subr.mxu0 0.0
    %478 = vmatpush1.msra.mxu0 0.0
    %479 = vmatprep.subr.mxu0 0.0
    %480 = vmatpush1.msra.mxu0 0.0
    %481 = vmatprep.subr.mxu0 0.0
    %482 = vmatpush1.msra.mxu0 0.0
    %483 = vmatprep.subr.mxu0 0.0
    %484 = vmatpush1.msra.mxu0 0.0
    %485 = vmatprep.subr.mxu0 0.0
    %486 = vmatpush1.msra.mxu0 0.0
    %487 = vmatprep.subr.mxu0 0.0
    %488 = vmatpush1.msra.mxu0 0.0
    %489 = vmatprep.subr.mxu0 0.0
    %490 = vmatpush1.msra.mxu0 0.0
    %491 = vmatprep.subr.mxu0 0.0
    %492 = vmatpush1.msra.mxu0 0.0
    %493 = vmatprep.subr.mxu0 0.0
    %494 = vmatpush1.msra.mxu0 0.0
    %495 = vmatprep.subr.mxu0 0.0
    %496 = vmatpush1.msra.mxu0 0.0
    %497 = vmatprep.subr.mxu0 0.0
    %498 = vmatpush1.msra.mxu0 0.0
    %499 = vmatprep.subr.mxu0 0.0
    %500 = vmatpush1.msra.mxu0 0.0
    %501 = vmatprep.subr.mxu0 0.0
    %502 = vmatpush1.msra.mxu0 0.0
    %503 = vmatprep.subr.mxu0 0.0
    %504 = vmatpush1.msra.mxu0 0.0
    %505 = vmatprep.mubr.f32.mxu0 0.0
    %506 = vmatmul.mubr.f32.gmra.mrb[0].mxu0 %v439
    %v507 = vpop.f32.mrb[0].mxu0
    %v508 = vadd.f32 0.0, %v507
    %v509 = vpop.f32.mrb[0].mxu0
    %v510 = vadd.f32 0.0, %v509
    %511 = vdwg.mxu0
    %v514 = vrot.slane %v508, 6
    %v515 = vrot.slane %v510, 6
    %v518 = vadd.f32 %v437, %v514
    %v519 = vadd.f32 %v438, %v515
    %v520 = vxor.u32 %v518, 2147483648
    %v521 = vxor.u32 %v519, 2147483648
    %v522 = vmul.f32 %v520, 1.442695
    %v523 = vpow.pop %v522
    %v524 = vmul.f32 %v521, 1.442695
    %v525 = vpow.pop %v524
    %v526 = vadd.f32 %v523, 1.0
    %v527 = vadd.f32 %v525, 1.0
    %v528 = vrcp.pop %v526
    %v529 = vmul.f32 1.0, %v528
    %v530 = vrcp.pop %v527
    %v531 = vmul.f32 1.0, %v530
    %v532 = vtanh.pop %v519
    %v534 = vrot.slane %v424, 6
    %v536 = vmul.f32 %v529, %v534
    %v537 = vmul.f32 %v529, %v532
    %539 = vrot.lane.b32.xlu0 %v537, 64
    %v540 = vpop.permute.xlu0 %539
    %v542 = vadd.f32 %v536, %v540
    %v543 = vtanh.pop %v542
    %v544 = vmul.f32 %v531, %v543
    %546 = vrot.lane.b32.xlu0 %v544, 64
    %v547 = vpop.permute.xlu0 %546
    %vm549 = vcmask 257026
    %550 = vst.msk [vmem:[#allocation2] sm:$0xc] %vm549, %v547
    %v551 = vrot.slane %v544, 2
    %552 = vrot.lane.b32.xlu0 %v551, 64
    %v553 = vpop.permute.xlu0 %552
    %v554 = vsel %vm328, %v553, 0
    %556 = vmatprep.subr.mxu0 %v305
    %557 = vmatpush1.msra.mxu0 %v304
    %558 = vmatprep.subr.mxu0 %v307
    %559 = vmatpush1.msra.mxu0 %v306
    %560 = vmatprep.subr.mxu0 %v309
    %561 = vmatpush1.msra.mxu0 %v308
    %562 = vmatprep.subr.mxu0 %v311
    %563 = vmatpush1.msra.mxu0 %v310
    %564 = vmatprep.subr.mxu0 %v313
    %565 = vmatpush1.msra.mxu0 %v312
    %566 = vmatprep.subr.mxu0 %v315
    %567 = vmatpush1.msra.mxu0 %v314
    %568 = vmatprep.subr.mxu0 %v317
    %569 = vmatpush1.msra.mxu0 %v316
    %570 = vmatprep.subr.mxu0 %v319
    %571 = vmatpush1.msra.mxu0 %v318
    %572 = vmatprep.subr.mxu0 0.0
    %573 = vmatpush1.msra.mxu0 0.0
    %574 = vmatprep.subr.mxu0 0.0
    %575 = vmatpush1.msra.mxu0 0.0
    %576 = vmatprep.subr.mxu0 0.0
    %577 = vmatpush1.msra.mxu0 0.0
    %578 = vmatprep.subr.mxu0 0.0
    %579 = vmatpush1.msra.mxu0 0.0
    %580 = vmatprep.subr.mxu0 0.0
    %581 = vmatpush1.msra.mxu0 0.0
    %582 = vmatprep.subr.mxu0 0.0
    %583 = vmatpush1.msra.mxu0 0.0
    %584 = vmatprep.subr.mxu0 0.0
    %585 = vmatpush1.msra.mxu0 0.0
    %586 = vmatprep.subr.mxu0 0.0
    %587 = vmatpush1.msra.mxu0 0.0
    %588 = vmatprep.subr.mxu0 0.0
    %589 = vmatpush1.msra.mxu0 0.0
    %590 = vmatprep.subr.mxu0 0.0
    %591 = vmatpush1.msra.mxu0 0.0
    %592 = vmatprep.subr.mxu0 0.0
    %593 = vmatpush1.msra.mxu0 0.0
    %594 = vmatprep.subr.mxu0 0.0
    %595 = vmatpush1.msra.mxu0 0.0
    %596 = vmatprep.subr.mxu0 0.0
    %597 = vmatpush1.msra.mxu0 0.0
    %598 = vmatprep.subr.mxu0 0.0
    %599 = vmatpush1.msra.mxu0 0.0
    %600 = vmatprep.subr.mxu0 0.0
    %601 = vmatpush1.msra.mxu0 0.0
    %602 = vmatprep.subr.mxu0 0.0
    %603 = vmatpush1.msra.mxu0 0.0
    %604 = vmatprep.subr.mxu0 0.0
    %605 = vmatpush1.msra.mxu0 0.0
    %606 = vmatprep.subr.mxu0 0.0
    %607 = vmatpush1.msra.mxu0 0.0
    %608 = vmatprep.subr.mxu0 0.0
    %609 = vmatpush1.msra.mxu0 0.0
    %610 = vmatprep.subr.mxu0 0.0
    %611 = vmatpush1.msra.mxu0 0.0
    %612 = vmatprep.subr.mxu0 0.0
    %613 = vmatpush1.msra.mxu0 0.0
    %614 = vmatprep.subr.mxu0 0.0
    %615 = vmatpush1.msra.mxu0 0.0
    %616 = vmatprep.subr.mxu0 0.0
    %617 = vmatpush1.msra.mxu0 0.0
    %618 = vmatprep.subr.mxu0 0.0
    %619 = vmatpush1.msra.mxu0 0.0
    %620 = vmatprep.mubr.f32.mxu0 0.0
    %621 = vmatmul.mubr.f32.gmra.mrb[0].mxu0 %v554
    %v622 = vpop.f32.mrb[0].mxu0
    %v623 = vadd.f32 0.0, %v622
    %v624 = vpop.f32.mrb[0].mxu0
    %v625 = vadd.f32 0.0, %v624
    %626 = vdwg.mxu0
    %v629 = vrot.slane %v623, 4
    %v630 = vrot.slane %v625, 4
    %v633 = vadd.f32 %v326, %v629
    %v634 = vadd.f32 %v327, %v630
    %v635 = vxor.u32 %v633, 2147483648
    %v636 = vxor.u32 %v634, 2147483648
    %v637 = vmul.f32 %v635, 1.442695
    %v638 = vpow.pop %v637
    %v639 = vmul.f32 %v636, 1.442695
    %v640 = vpow.pop %v639
    %v641 = vadd.f32 %v638, 1.0
    %v642 = vadd.f32 %v640, 1.0
    %v643 = vrcp.pop %v641
    %v644 = vmul.f32 1.0, %v643
    %v645 = vrcp.pop %v642
    %v646 = vmul.f32 1.0, %v645
    %v647 = vtanh.pop %v634
    %v649 = vrot.slane %v542, 6
    %v651 = vmul.f32 %v644, %v649
    %v652 = vmul.f32 %v644, %v647
    %654 = vrot.lane.b32.xlu0 %v652, 64
    %v655 = vpop.permute.xlu0 %654
    %v657 = vadd.f32 %v651, %v655
    %v658 = vtanh.pop %v657
    %v659 = vmul.f32 %v646, %v658
    %661 = vrot.lane.b32.xlu0 %v659, 64
    %v662 = vpop.permute.xlu0 %661
    %vm664 = vcmask 259076
    %665 = vst.msk [vmem:[#allocation2] sm:$0x30] %vm664, %v662
    %v666 = vrot.slane %v659, 4
    %667 = vrot.lane.b32.xlu0 %v666, 64
    %v668 = vpop.permute.xlu0 %667
    %v669 = vsel %vm328, %v668, 0
    %671 = vmatprep.subr.mxu0 %v305
    %672 = vmatpush1.msra.mxu0 %v304
    %673 = vmatprep.subr.mxu0 %v307
    %674 = vmatpush1.msra.mxu0 %v306
    %675 = vmatprep.subr.mxu0 %v309
    %676 = vmatpush1.msra.mxu0 %v308
    %677 = vmatprep.subr.mxu0 %v311
    %678 = vmatpush1.msra.mxu0 %v310
    %679 = vmatprep.subr.mxu0 %v313
    %680 = vmatpush1.msra.mxu0 %v312
    %681 = vmatprep.subr.mxu0 %v315
    %682 = vmatpush1.msra.mxu0 %v314
    %683 = vmatprep.subr.mxu0 %v317
    %684 = vmatpush1.msra.mxu0 %v316
    %685 = vmatprep.subr.mxu0 %v319
    %686 = vmatpush1.msra.mxu0 %v318
    %687 = vmatprep.subr.mxu0 0.0
    %688 = vmatpush1.msra.mxu0 0.0
    %689 = vmatprep.subr.mxu0 0.0
    %690 = vmatpush1.msra.mxu0 0.0
    %691 = vmatprep.subr.mxu0 0.0
    %692 = vmatpush1.msra.mxu0 0.0
    %693 = vmatprep.subr.mxu0 0.0
    %694 = vmatpush1.msra.mxu0 0.0
    %695 = vmatprep.subr.mxu0 0.0
    %696 = vmatpush1.msra.mxu0 0.0
    %697 = vmatprep.subr.mxu0 0.0
    %698 = vmatpush1.msra.mxu0 0.0
    %699 = vmatprep.subr.mxu0 0.0
    %700 = vmatpush1.msra.mxu0 0.0
    %701 = vmatprep.subr.mxu0 0.0
    %702 = vmatpush1.msra.mxu0 0.0
    %703 = vmatprep.subr.mxu0 0.0
    %704 = vmatpush1.msra.mxu0 0.0
    %705 = vmatprep.subr.mxu0 0.0
    %706 = vmatpush1.msra.mxu0 0.0
    %707 = vmatprep.subr.mxu0 0.0
    %708 = vmatpush1.msra.mxu0 0.0
    %709 = vmatprep.subr.mxu0 0.0
    %710 = vmatpush1.msra.mxu0 0.0
    %711 = vmatprep.subr.mxu0 0.0
    %712 = vmatpush1.msra.mxu0 0.0
    %713 = vmatprep.subr.mxu0 0.0
    %714 = vmatpush1.msra.mxu0 0.0
    %715 = vmatprep.subr.mxu0 0.0
    %716 = vmatpush1.msra.mxu0 0.0
    %717 = vmatprep.subr.mxu0 0.0
    %718 = vmatpush1.msra.mxu0 0.0
    %719 = vmatprep.subr.mxu0 0.0
    %720 = vmatpush1.msra.mxu0 0.0
    %721 = vmatprep.subr.mxu0 0.0
    %722 = vmatpush1.msra.mxu0 0.0
    %723 = vmatprep.subr.mxu0 0.0
    %724 = vmatpush1.msra.mxu0 0.0
    %725 = vmatprep.subr.mxu0 0.0
    %726 = vmatpush1.msra.mxu0 0.0
    %727 = vmatprep.subr.mxu0 0.0
    %728 = vmatpush1.msra.mxu0 0.0
    %729 = vmatprep.subr.mxu0 0.0
    %730 = vmatpush1.msra.mxu0 0.0
    %731 = vmatprep.subr.mxu0 0.0
    %732 = vmatpush1.msra.mxu0 0.0
    %733 = vmatprep.subr.mxu0 0.0
    %734 = vmatpush1.msra.mxu0 0.0
    %735 = vmatprep.mubr.f32.mxu0 0.0
    %736 = vmatmul.mubr.f32.gmra.mrb[0].mxu0 %v669
    %v737 = vpop.f32.mrb[0].mxu0
    %v738 = vadd.f32 0.0, %v737
    %v739 = vpop.f32.mrb[0].mxu0
    %v740 = vadd.f32 0.0, %v739
    %741 = vdwg.mxu0
    %v744 = vrot.slane %v738, 2
    %v745 = vrot.slane %v740, 2
    %v748 = vadd.f32 %v437, %v744
    %v749 = vadd.f32 %v438, %v745
    %v750 = vxor.u32 %v748, 2147483648
    %v751 = vxor.u32 %v749, 2147483648
    %v752 = vmul.f32 %v750, 1.442695
    %v753 = vpow.pop %v752
    %v754 = vmul.f32 %v751, 1.442695
    %v755 = vpow.pop %v754
    %v756 = vadd.f32 %v753, 1.0
    %v757 = vadd.f32 %v755, 1.0
    %v758 = vrcp.pop %v756
    %v759 = vmul.f32 1.0, %v758
    %v760 = vrcp.pop %v757
    %v761 = vmul.f32 1.0, %v760
    %v762 = vtanh.pop %v749
    %v764 = vrot.slane %v657, 6
    %v766 = vmul.f32 %v759, %v764
    %v767 = vmul.f32 %v759, %v762
    %769 = vrot.lane.b32.xlu0 %v767, 64
    %v770 = vpop.permute.xlu0 %769
    %v772 = vadd.f32 %v766, %v770
    %v773 = vtanh.pop %v772
    %v774 = vmul.f32 %v761, %v773
    %776 = vrot.lane.b32.xlu0 %v774, 64
    %v777 = vpop.permute.xlu0 %776
    %vm779 = vcmask 261126
    %780 = vst.msk [vmem:[#allocation2] sm:$0xc0] %vm779, %v777
    %v783 = vrot.slane %v294, 6
    %v784 = vrot.slane %v296, 6
    %v787 = vadd.f32 %v211, %v783
    %v788 = vadd.f32 %v213, %v784
    %v789 = vrot.slane %v774, 6
    %790 = vrot.lane.b32.xlu0 %v789, 64
    %v791 = vpop.permute.xlu0 %790
    %v792 = vsel %vm328, %v791, 0
    %794 = vmatprep.subr.mxu0 %v305
    %795 = vmatpush1.msra.mxu0 %v304
    %796 = vmatprep.subr.mxu0 %v307
    %797 = vmatpush1.msra.mxu0 %v306
    %798 = vmatprep.subr.mxu0 %v309
    %799 = vmatpush1.msra.mxu0 %v308
    %800 = vmatprep.subr.mxu0 %v311
    %801 = vmatpush1.msra.mxu0 %v310
    %802 = vmatprep.subr.mxu0 %v313
    %803 = vmatpush1.msra.mxu0 %v312
    %804 = vmatprep.subr.mxu0 %v315
    %805 = vmatpush1.msra.mxu0 %v314
    %806 = vmatprep.subr.mxu0 %v317
    %807 = vmatpush1.msra.mxu0 %v316
    %808 = vmatprep.subr.mxu0 %v319
    %809 = vmatpush1.msra.mxu0 %v318
    %810 = vmatprep.subr.mxu0 0.0
    %811 = vmatpush1.msra.mxu0 0.0
    %812 = vmatprep.subr.mxu0 0.0
    %813 = vmatpush1.msra.mxu0 0.0
    %814 = vmatprep.subr.mxu0 0.0
    %815 = vmatpush1.msra.mxu0 0.0
    %816 = vmatprep.subr.mxu0 0.0
    %817 = vmatpush1.msra.mxu0 0.0
    %818 = vmatprep.subr.mxu0 0.0
    %819 = vmatpush1.msra.mxu0 0.0
    %820 = vmatprep.subr.mxu0 0.0
    %821 = vmatpush1.msra.mxu0 0.0
    %822 = vmatprep.subr.mxu0 0.0
    %823 = vmatpush1.msra.mxu0 0.0
    %824 = vmatprep.subr.mxu0 0.0
    %825 = vmatpush1.msra.mxu0 0.0
    %826 = vmatprep.subr.mxu0 0.0
    %827 = vmatpush1.msra.mxu0 0.0
    %828 = vmatprep.subr.mxu0 0.0
    %829 = vmatpush1.msra.mxu0 0.0
    %830 = vmatprep.subr.mxu0 0.0
    %831 = vmatpush1.msra.mxu0 0.0
    %832 = vmatprep.subr.mxu0 0.0
    %833 = vmatpush1.msra.mxu0 0.0
    %834 = vmatprep.subr.mxu0 0.0
    %835 = vmatpush1.msra.mxu0 0.0
    %836 = vmatprep.subr.mxu0 0.0
    %837 = vmatpush1.msra.mxu0 0.0
    %838 = vmatprep.subr.mxu0 0.0
    %839 = vmatpush1.msra.mxu0 0.0
    %840 = vmatprep.subr.mxu0 0.0
    %841 = vmatpush1.msra.mxu0 0.0
    %842 = vmatprep.subr.mxu0 0.0
    %843 = vmatpush1.msra.mxu0 0.0
    %844 = vmatprep.subr.mxu0 0.0
    %845 = vmatpush1.msra.mxu0 0.0
    %846 = vmatprep.subr.mxu0 0.0
    %847 = vmatpush1.msra.mxu0 0.0
    %848 = vmatprep.subr.mxu0 0.0
    %849 = vmatpush1.msra.mxu0 0.0
    %850 = vmatprep.subr.mxu0 0.0
    %851 = vmatpush1.msra.mxu0 0.0
    %852 = vmatprep.subr.mxu0 0.0
    %853 = vmatpush1.msra.mxu0 0.0
    %854 = vmatprep.subr.mxu0 0.0
    %855 = vmatpush1.msra.mxu0 0.0
    %856 = vmatprep.subr.mxu0 0.0
    %857 = vmatpush1.msra.mxu0 0.0
    %858 = vmatprep.mubr.f32.mxu0 0.0
    %859 = vmatmul.mubr.f32.gmra.mrb[0].mxu0 %v792
    %v860 = vpop.f32.mrb[0].mxu0
    %v861 = vadd.f32 0.0, %v860
    %v862 = vpop.f32.mrb[0].mxu0
    %v863 = vadd.f32 0.0, %v862
    %864 = vdwg.mxu0
    %v865 = vadd.f32 %v787, %v861
    %v866 = vadd.f32 %v788, %v863
    %v867 = vxor.u32 %v865, 2147483648
    %v868 = vxor.u32 %v866, 2147483648
    %v869 = vmul.f32 %v867, 1.442695
    %v870 = vpow.pop %v869
    %v871 = vmul.f32 %v868, 1.442695
    %v872 = vpow.pop %v871
    %v873 = vadd.f32 %v870, 1.0
    %v874 = vadd.f32 %v872, 1.0
    %v875 = vrcp.pop %v873
    %v876 = vmul.f32 1.0, %v875
    %v877 = vrcp.pop %v874
    %v878 = vmul.f32 1.0, %v877
    %v879 = vtanh.pop %v866
    %v881 = vrot.slane %v772, 6
    %v883 = vmul.f32 %v876, %v881
    %v884 = vmul.f32 %v876, %v879
    %886 = vrot.lane.b32.xlu0 %v884, 64
    %v887 = vpop.permute.xlu0 %886
    %v889 = vadd.f32 %v883, %v887
    %v890 = vtanh.pop %v889
    %v891 = vmul.f32 %v878, %v890
    %893 = vrot.lane.b32.xlu0 %v891, 64
    %v894 = vpop.permute.xlu0 %893
    %896 = vst.msk [vmem:[#allocation2 + $0x8] sm:$0x3] %vm431, %v894
    %v897 = vrot.slane %v294, 2
    %v898 = vrot.slane %v296, 2
    %v901 = vadd.f32 %v211, %v897
    %v902 = vadd.f32 %v213, %v898
    %v903 = vsel %vm328, %v894, 0
    %905 = vmatprep.subr.mxu0 %v305
    %906 = vmatpush1.msra.mxu0 %v304
    %907 = vmatprep.subr.mxu0 %v307
    %908 = vmatpush1.msra.mxu0 %v306
    %909 = vmatprep.subr.mxu0 %v309
    %910 = vmatpush1.msra.mxu0 %v308
    %911 = vmatprep.subr.mxu0 %v311
    %912 = vmatpush1.msra.mxu0 %v310
    %913 = vmatprep.subr.mxu0 %v313
    %914 = vmatpush1.msra.mxu0 %v312
    %915 = vmatprep.subr.mxu0 %v315
    %916 = vmatpush1.msra.mxu0 %v314
    %917 = vmatprep.subr.mxu0 %v317
    %918 = vmatpush1.msra.mxu0 %v316
    %919 = vmatprep.subr.mxu0 %v319
    %920 = vmatpush1.msra.mxu0 %v318
    %921 = vmatprep.subr.mxu0 0.0
    %922 = vmatpush1.msra.mxu0 0.0
    %923 = vmatprep.subr.mxu0 0.0
    %924 = vmatpush1.msra.mxu0 0.0
    %925 = vmatprep.subr.mxu0 0.0
    %926 = vmatpush1.msra.mxu0 0.0
    %927 = vmatprep.subr.mxu0 0.0
    %928 = vmatpush1.msra.mxu0 0.0
    %929 = vmatprep.subr.mxu0 0.0
    %930 = vmatpush1.msra.mxu0 0.0
    %931 = vmatprep.subr.mxu0 0.0
    %932 = vmatpush1.msra.mxu0 0.0
    %933 = vmatprep.subr.mxu0 0.0
    %934 = vmatpush1.msra.mxu0 0.0
    %935 = vmatprep.subr.mxu0 0.0
    %936 = vmatpush1.msra.mxu0 0.0
    %937 = vmatprep.subr.mxu0 0.0
    %938 = vmatpush1.msra.mxu0 0.0
    %939 = vmatprep.subr.mxu0 0.0
    %940 = vmatpush1.msra.mxu0 0.0
    %941 = vmatprep.subr.mxu0 0.0
    %942 = vmatpush1.msra.mxu0 0.0
    %943 = vmatprep.subr.mxu0 0.0
    %944 = vmatpush1.msra.mxu0 0.0
    %945 = vmatprep.subr.mxu0 0.0
    %946 = vmatpush1.msra.mxu0 0.0
    %947 = vmatprep.subr.mxu0 0.0
    %948 = vmatpush1.msra.mxu0 0.0
    %949 = vmatprep.subr.mxu0 0.0
    %950 = vmatpush1.msra.mxu0 0.0
    %951 = vmatprep.subr.mxu0 0.0
    %952 = vmatpush1.msra.mxu0 0.0
    %953 = vmatprep.subr.mxu0 0.0
    %954 = vmatpush1.msra.mxu0 0.0
    %955 = vmatprep.subr.mxu0 0.0
    %956 = vmatpush1.msra.mxu0 0.0
    %957 = vmatprep.subr.mxu0 0.0
    %958 = vmatpush1.msra.mxu0 0.0
    %959 = vmatprep.subr.mxu0 0.0
    %960 = vmatpush1.msra.mxu0 0.0
    %961 = vmatprep.subr.mxu0 0.0
    %962 = vmatpush1.msra.mxu0 0.0
    %963 = vmatprep.subr.mxu0 0.0
    %964 = vmatpush1.msra.mxu0 0.0
    %965 = vmatprep.subr.mxu0 0.0
    %966 = vmatpush1.msra.mxu0 0.0
    %967 = vmatprep.subr.mxu0 0.0
    %968 = vmatpush1.msra.mxu0 0.0
    %969 = vmatprep.mubr.f32.mxu0 0.0
    %970 = vmatmul.mubr.f32.gmra.mrb[0].mxu0 %v903
    %v971 = vpop.f32.mrb[0].mxu0
    %v972 = vadd.f32 0.0, %v971
    %v973 = vpop.f32.mrb[0].mxu0
    %v974 = vadd.f32 0.0, %v973
    %975 = vdwg.mxu0
    %v978 = vrot.slane %v972, 6
    %v979 = vrot.slane %v974, 6
    %v982 = vadd.f32 %v901, %v978
    %v983 = vadd.f32 %v902, %v979
    %v984 = vxor.u32 %v982, 2147483648
    %v985 = vxor.u32 %v983, 2147483648
    %v986 = vmul.f32 %v984, 1.442695
    %v987 = vpow.pop %v986
    %v988 = vmul.f32 %v985, 1.442695
    %v989 = vpow.pop %v988
    %v990 = vadd.f32 %v987, 1.0
    %v991 = vadd.f32 %v989, 1.0
    %v992 = vrcp.pop %v990
    %v993 = vmul.f32 1.0, %v992
    %v994 = vrcp.pop %v991
    %v995 = vmul.f32 1.0, %v994
    %v996 = vtanh.pop %v983
    %v998 = vrot.slane %v889, 6
    %v1000 = vmul.f32 %v993, %v998
    %v1001 = vmul.f32 %v993, %v996
    %1003 = vrot.lane.b32.xlu0 %v1001, 64
    %v1004 = vpop.permute.xlu0 %1003
    %v1006 = vadd.f32 %v1000, %v1004
    %v1007 = vtanh.pop %v1006
    %v1008 = vmul.f32 %v995, %v1007
    %1010 = vrot.lane.b32.xlu0 %v1008, 64
    %v1011 = vpop.permute.xlu0 %1010
    %1013 = vst.msk [vmem:[#allocation2 + $0x8] sm:$0xc] %vm549, %v1011
    %v1014 = vrot.slane %v1008, 2
    %1015 = vrot.lane.b32.xlu0 %v1014, 64
    %v1016 = vpop.permute.xlu0 %1015
    %v1017 = vsel %vm328, %v1016, 0
    %1019 = vmatprep.subr.mxu0 %v305
    %1020 = vmatpush1.msra.mxu0 %v304
    %1021 = vmatprep.subr.mxu0 %v307
    %1022 = vmatpush1.msra.mxu0 %v306
    %1023 = vmatprep.subr.mxu0 %v309
    %1024 = vmatpush1.msra.mxu0 %v308
    %1025 = vmatprep.subr.mxu0 %v311
    %1026 = vmatpush1.msra.mxu0 %v310
    %1027 = vmatprep.subr.mxu0 %v313
    %1028 = vmatpush1.msra.mxu0 %v312
    %1029 = vmatprep.subr.mxu0 %v315
    %1030 = vmatpush1.msra.mxu0 %v314
    %1031 = vmatprep.subr.mxu0 %v317
    %1032 = vmatpush1.msra.mxu0 %v316
    %1033 = vmatprep.subr.mxu0 %v319
    %1034 = vmatpush1.msra.mxu0 %v318
    %1035 = vmatprep.subr.mxu0 0.0
    %1036 = vmatpush1.msra.mxu0 0.0
    %1037 = vmatprep.subr.mxu0 0.0
    %1038 = vmatpush1.msra.mxu0 0.0
    %1039 = vmatprep.subr.mxu0 0.0
    %1040 = vmatpush1.msra.mxu0 0.0
    %1041 = vmatprep.subr.mxu0 0.0
    %1042 = vmatpush1.msra.mxu0 0.0
    %1043 = vmatprep.subr.mxu0 0.0
    %1044 = vmatpush1.msra.mxu0 0.0
    %1045 = vmatprep.subr.mxu0 0.0
    %1046 = vmatpush1.msra.mxu0 0.0
    %1047 = vmatprep.subr.mxu0 0.0
    %1048 = vmatpush1.msra.mxu0 0.0
    %1049 = vmatprep.subr.mxu0 0.0
    %1050 = vmatpush1.msra.mxu0 0.0
    %1051 = vmatprep.subr.mxu0 0.0
    %1052 = vmatpush1.msra.mxu0 0.0
    %1053 = vmatprep.subr.mxu0 0.0
    %1054 = vmatpush1.msra.mxu0 0.0
    %1055 = vmatprep.subr.mxu0 0.0
    %1056 = vmatpush1.msra.mxu0 0.0
    %1057 = vmatprep.subr.mxu0 0.0
    %1058 = vmatpush1.msra.mxu0 0.0
    %1059 = vmatprep.subr.mxu0 0.0
    %1060 = vmatpush1.msra.mxu0 0.0
    %1061 = vmatprep.subr.mxu0 0.0
    %1062 = vmatpush1.msra.mxu0 0.0
    %1063 = vmatprep.subr.mxu0 0.0
    %1064 = vmatpush1.msra.mxu0 0.0
    %1065 = vmatprep.subr.mxu0 0.0
    %1066 = vmatpush1.msra.mxu0 0.0
    %1067 = vmatprep.subr.mxu0 0.0
    %1068 = vmatpush1.msra.mxu0 0.0
    %1069 = vmatprep.subr.mxu0 0.0
    %1070 = vmatpush1.msra.mxu0 0.0
    %1071 = vmatprep.subr.mxu0 0.0
    %1072 = vmatpush1.msra.mxu0 0.0
    %1073 = vmatprep.subr.mxu0 0.0
    %1074 = vmatpush1.msra.mxu0 0.0
    %1075 = vmatprep.subr.mxu0 0.0
    %1076 = vmatpush1.msra.mxu0 0.0
    %1077 = vmatprep.subr.mxu0 0.0
    %1078 = vmatpush1.msra.mxu0 0.0
    %1079 = vmatprep.subr.mxu0 0.0
    %1080 = vmatpush1.msra.mxu0 0.0
    %1081 = vmatprep.subr.mxu0 0.0
    %1082 = vmatpush1.msra.mxu0 0.0
    %1083 = vmatprep.mubr.f32.mxu0 0.0
    %1084 = vmatmul.mubr.f32.gmra.mrb[0].mxu0 %v1017
    %v1085 = vpop.f32.mrb[0].mxu0
    %v1086 = vadd.f32 0.0, %v1085
    %v1087 = vpop.f32.mrb[0].mxu0
    %v1088 = vadd.f32 0.0, %v1087
    %1089 = vdwg.mxu0
    %v1092 = vrot.slane %v1086, 4
    %v1093 = vrot.slane %v1088, 4
    %v1096 = vadd.f32 %v787, %v1092
    %v1097 = vadd.f32 %v788, %v1093
    %v1098 = vxor.u32 %v1096, 2147483648
    %v1099 = vxor.u32 %v1097, 2147483648
    %v1100 = vmul.f32 %v1098, 1.442695
    %v1101 = vpow.pop %v1100
    %v1102 = vmul.f32 %v1099, 1.442695
    %v1103 = vpow.pop %v1102
    %v1104 = vadd.f32 %v1101, 1.0
    %v1105 = vadd.f32 %v1103, 1.0
    %v1106 = vrcp.pop %v1104
    %v1107 = vmul.f32 1.0, %v1106
    %v1108 = vrcp.pop %v1105
    %v1109 = vmul.f32 1.0, %v1108
    %v1110 = vtanh.pop %v1097
    %v1112 = vrot.slane %v1006, 6
    %v1114 = vmul.f32 %v1107, %v1112
    %v1115 = vmul.f32 %v1107, %v1110
    %1117 = vrot.lane.b32.xlu0 %v1115, 64
    %v1118 = vpop.permute.xlu0 %1117
    %v1120 = vadd.f32 %v1114, %v1118
    %v1121 = vtanh.pop %v1120
    %v1122 = vmul.f32 %v1109, %v1121
    %1124 = vrot.lane.b32.xlu0 %v1122, 64
    %v1125 = vpop.permute.xlu0 %1124
    %1127 = vst.msk [vmem:[#allocation2 + $0x8] sm:$0x30] %vm664, %v1125
    %v1128 = vrot.slane %v1122, 4
    %1129 = vrot.lane.b32.xlu0 %v1128, 64
    %v1130 = vpop.permute.xlu0 %1129
    %v1131 = vsel %vm328, %v1130, 0
    %1133 = vmatprep.subr.mxu0 %v305
    %1134 = vmatpush1.msra.mxu0 %v304
    %1135 = vmatprep.subr.mxu0 %v307
    %1136 = vmatpush1.msra.mxu0 %v306
    %1137 = vmatprep.subr.mxu0 %v309
    %1138 = vmatpush1.msra.mxu0 %v308
    %1139 = vmatprep.subr.mxu0 %v311
    %1140 = vmatpush1.msra.mxu0 %v310
    %1141 = vmatprep.subr.mxu0 %v313
    %1142 = vmatpush1.msra.mxu0 %v312
    %1143 = vmatprep.subr.mxu0 %v315
    %1144 = vmatpush1.msra.mxu0 %v314
    %1145 = vmatprep.subr.mxu0 %v317
    %1146 = vmatpush1.msra.mxu0 %v316
    %1147 = vmatprep.subr.mxu0 %v319
    %1148 = vmatpush1.msra.mxu0 %v318
    %1149 = vmatprep.subr.mxu0 0.0
    %1150 = vmatpush1.msra.mxu0 0.0
    %1151 = vmatprep.subr.mxu0 0.0
    %1152 = vmatpush1.msra.mxu0 0.0
    %1153 = vmatprep.subr.mxu0 0.0
    %1154 = vmatpush1.msra.mxu0 0.0
    %1155 = vmatprep.subr.mxu0 0.0
    %1156 = vmatpush1.msra.mxu0 0.0
    %1157 = vmatprep.subr.mxu0 0.0
    %1158 = vmatpush1.msra.mxu0 0.0
    %1159 = vmatprep.subr.mxu0 0.0
    %1160 = vmatpush1.msra.mxu0 0.0
    %1161 = vmatprep.subr.mxu0 0.0
    %1162 = vmatpush1.msra.mxu0 0.0
    %1163 = vmatprep.subr.mxu0 0.0
    %1164 = vmatpush1.msra.mxu0 0.0
    %1165 = vmatprep.subr.mxu0 0.0
    %1166 = vmatpush1.msra.mxu0 0.0
    %1167 = vmatprep.subr.mxu0 0.0
    %1168 = vmatpush1.msra.mxu0 0.0
    %1169 = vmatprep.subr.mxu0 0.0
    %1170 = vmatpush1.msra.mxu0 0.0
    %1171 = vmatprep.subr.mxu0 0.0
    %1172 = vmatpush1.msra.mxu0 0.0
    %1173 = vmatprep.subr.mxu0 0.0
    %1174 = vmatpush1.msra.mxu0 0.0
    %1175 = vmatprep.subr.mxu0 0.0
    %1176 = vmatpush1.msra.mxu0 0.0
    %1177 = vmatprep.subr.mxu0 0.0
    %1178 = vmatpush1.msra.mxu0 0.0
    %1179 = vmatprep.subr.mxu0 0.0
    %1180 = vmatpush1.msra.mxu0 0.0
    %1181 = vmatprep.subr.mxu0 0.0
    %1182 = vmatpush1.msra.mxu0 0.0
    %1183 = vmatprep.subr.mxu0 0.0
    %1184 = vmatpush1.msra.mxu0 0.0
    %1185 = vmatprep.subr.mxu0 0.0
    %1186 = vmatpush1.msra.mxu0 0.0
    %1187 = vmatprep.subr.mxu0 0.0
    %1188 = vmatpush1.msra.mxu0 0.0
    %1189 = vmatprep.subr.mxu0 0.0
    %1190 = vmatpush1.msra.mxu0 0.0
    %1191 = vmatprep.subr.mxu0 0.0
    %1192 = vmatpush1.msra.mxu0 0.0
    %1193 = vmatprep.subr.mxu0 0.0
    %1194 = vmatpush1.msra.mxu0 0.0
    %1195 = vmatprep.subr.mxu0 0.0
    %1196 = vmatpush1.msra.mxu0 0.0
    %1197 = vmatprep.mubr.f32.mxu0 0.0
    %1198 = vmatmul.mubr.f32.gmra.mrb[0].mxu0 %v1131
    %v1199 = vpop.f32.mrb[0].mxu0
    %v1200 = vadd.f32 0.0, %v1199
    %v1201 = vpop.f32.mrb[0].mxu0
    %v1202 = vadd.f32 0.0, %v1201
    %1203 = vdwg.mxu0
    %v1206 = vrot.slane %v1200, 2
    %v1207 = vrot.slane %v1202, 2
    %v1210 = vadd.f32 %v901, %v1206
    %v1211 = vadd.f32 %v902, %v1207
    %v1212 = vxor.u32 %v1210, 2147483648
    %v1213 = vxor.u32 %v1211, 2147483648
    %v1214 = vmul.f32 %v1212, 1.442695
    %v1215 = vpow.pop %v1214
    %v1216 = vmul.f32 %v1213, 1.442695
    %v1217 = vpow.pop %v1216
    %v1218 = vadd.f32 %v1215, 1.0
    %v1219 = vadd.f32 %v1217, 1.0
    %v1220 = vrcp.pop %v1218
    %v1221 = vmul.f32 1.0, %v1220
    %v1222 = vrcp.pop %v1219
    %v1223 = vmul.f32 1.0, %v1222
    %v1224 = vtanh.pop %v1211
    %v1226 = vrot.slane %v1120, 6
    %v1228 = vmul.f32 %v1221, %v1226
    %v1229 = vmul.f32 %v1221, %v1224
    %1231 = vrot.lane.b32.xlu0 %v1229, 64
    %v1232 = vpop.permute.xlu0 %1231
    %v1234 = vadd.f32 %v1228, %v1232
    %v1235 = vtanh.pop %v1234
    %v1236 = vmul.f32 %v1223, %v1235
    %1238 = vrot.lane.b32.xlu0 %v1236, 64
    %v1239 = vpop.permute.xlu0 %1238
    %1241 = vst.msk [vmem:[#allocation2 + $0x8] sm:$0xc0] %vm779, %v1239
    %1242 = vrot.lane.b32.xlu0 %v426, 32
    %v1243 = vpop.permute.xlu0 %1242
    %v1245 = vrot.slane %v1236, 6
    %1246 = vrot.lane.b32.xlu0 %v1245, 32
    %v1247 = vpop.permute.xlu0 %1246
    %vm1249 = vcmask 130048
    %v1250 = vsel %vm1249, %v1243, %v1247
    %1251 = vst.msk [vmem:[#allocation3] sm:$0x3] %vm431, %v1250
    %1252 = vrot.lane.b32.xlu0 %v544, 32
    %v1253 = vpop.permute.xlu0 %1252
    %v1255 = vrot.slane %v1122, 2
    %1256 = vrot.lane.b32.xlu0 %v1255, 32
    %v1257 = vpop.permute.xlu0 %1256
    %v1259 = vsel %vm1249, %v1253, %v1257
    %1260 = vst.msk [vmem:[#allocation3] sm:$0xc] %vm549, %v1259
    %1261 = vrot.lane.b32.xlu0 %v659, 32
    %v1262 = vpop.permute.xlu0 %1261
    %v1264 = vrot.slane %v1008, 6
    %1265 = vrot.lane.b32.xlu0 %v1264, 32
    %v1266 = vpop.permute.xlu0 %1265
    %v1268 = vsel %vm1249, %v1262, %v1266
    %1269 = vst.msk [vmem:[#allocation3] sm:$0x30] %vm664, %v1268
    %1270 = vrot.lane.b32.xlu0 %v774, 32
    %v1271 = vpop.permute.xlu0 %1270
    %v1273 = vrot.slane %v891, 2
    %1274 = vrot.lane.b32.xlu0 %v1273, 32
    %v1275 = vpop.permute.xlu0 %1274
    %v1277 = vsel %vm1249, %v1271, %v1275
    %1278 = vst.msk [vmem:[#allocation3] sm:$0xc0] %vm779, %v1277
    %1279 = vrot.lane.b32.xlu0 %v891, 32
    %v1280 = vpop.permute.xlu0 %1279
    %1282 = vrot.lane.b32.xlu0 %v789, 32
    %v1283 = vpop.permute.xlu0 %1282
    %v1285 = vsel %vm1249, %v1280, %v1283
    %1286 = vst.msk [vmem:[#allocation3 + $0x8] sm:$0x3] %vm431, %v1285
    %1287 = vrot.lane.b32.xlu0 %v1008, 32
    %v1288 = vpop.permute.xlu0 %1287
    %v1290 = vrot.slane %v659, 2
    %1291 = vrot.lane.b32.xlu0 %v1290, 32
    %v1292 = vpop.permute.xlu0 %1291
    %v1294 = vsel %vm1249, %v1288, %v1292
    %1295 = vst.msk [vmem:[#allocation3 + $0x8] sm:$0xc] %vm549, %v1294
    %1296 = vrot.lane.b32.xlu0 %v1122, 32
    %v1297 = vpop.permute.xlu0 %1296
    %v1299 = vrot.slane %v544, 6
    %1300 = vrot.lane.b32.xlu0 %v1299, 32
    %v1301 = vpop.permute.xlu0 %1300
    %v1303 = vsel %vm1249, %v1297, %v1301
    %1304 = vst.msk [vmem:[#allocation3 + $0x8] sm:$0x30] %vm664, %v1303
    %1305 = vrot.lane.b32.xlu0 %v1236, 32
    %v1306 = vpop.permute.xlu0 %1305
    %v1308 = vrot.slane %v426, 2
    %1309 = vrot.lane.b32.xlu0 %v1308, 32
    %v1310 = vpop.permute.xlu0 %1309
    %v1312 = vsel %vm1249, %v1306, %v1310
    %1313 = vst.msk [vmem:[#allocation3 + $0x8] sm:$0xc0] %vm779, %v1312
    %v1314 = vld [vmem:[#allocation2] sm:$0xff]
    %v1315 = vld [vmem:[#allocation2 + $0x8] sm:$0xff]
    %v1316 = vld [vmem:[#allocation3] sm:$0xff]
    %v1317 = vld [vmem:[#allocation3 + $0x8] sm:$0xff]
    %v1318 = vld [vmem:[%s5] sm:$0xff]
    %v1319 = vld [vmem:[%s5 + $0x8] sm:$0xff]
    %v1320 = vld [vmem:[%s5 + $0x10] sm:$0xff]
    %v1321 = vld [vmem:[%s5 + $0x18] sm:$0xff]
    %v1322 = vld [vmem:[%s6] sm:$0xff]
    %v1323 = vld [vmem:[%s6 + $0x8] sm:$0xff]
    %v1324 = vld [vmem:[%s6 + $0x10] sm:$0xff]
    %v1325 = vld [vmem:[%s6 + $0x18] sm:$0xff]
    %v1326 = vld [vmem:[%s7] sm:$0x1]
    %v1327 = vld [vmem:[%s8] sm:$0x1]
    %v1328 = vld [vmem:[#allocation6] sm:$0xff]
    %v1329 = vld [vmem:[#allocation6 + $0x8] sm:$0xff]
    %v1330 = vld [vmem:[#allocation6 + $0x10] sm:$0xff]
    %v1331 = vld [vmem:[#allocation6 + $0x18] sm:$0xff]
    %v1332 = vld [vmem:[%s10] sm:$0x1]
    %v1333 = vld [vmem:[%s11] sm:$0x1]
    %v1334 = vld [vmem:[%s12] sm:$0xf]
    %v1335 = vld [vmem:[#allocation8] sm:$0x1]
    %v1336 = vld [vmem:[%s14] sm:$0xff]
    %v1337 = vld [vmem:[%s14 + $0x8] sm:$0xff]
    %v1338 = vld [vmem:[%s14 + $0x10] sm:$0xff]
    %v1339 = vld [vmem:[%s14 + $0x18] sm:$0xff]
    %v1340 = vld [vmem:[#allocation9] sm:$0x1]
    %vm1341 = vcmask 261120
    %v1343 = vsel %vm1341, %v1316, 0
    %v1346 = vsel %vm1341, %v1317, 0
    %1348 = vmatprep.subr.mxu0 0.0
    %1349 = vmatpush1.msra.mxu0 %v1322
    %1350 = vmatprep.subr.mxu0 0.0
    %1351 = vmatpush1.msra.mxu0 %v1323
    %1352 = vmatprep.subr.mxu0 0.0
    %1353 = vmatpush1.msra.mxu0 %v1324
    %1354 = vmatprep.subr.mxu0 0.0
    %1355 = vmatpush1.msra.mxu0 %v1325
    %1356 = vmatprep.subr.mxu0 0.0
    %1357 = vmatpush1.msra.mxu0 0.0
    %1358 = vmatprep.subr.mxu0 0.0
    %1359 = vmatpush1.msra.mxu0 0.0
    %1360 = vmatprep.subr.mxu0 0.0
    %1361 = vmatpush1.msra.mxu0 0.0
    %1362 = vmatprep.subr.mxu0 0.0
    %1363 = vmatpush1.msra.mxu0 0.0
    %1364 = vmatprep.subr.mxu0 0.0
    %1365 = vmatpush1.msra.mxu0 0.0
    %1366 = vmatprep.subr.mxu0 0.0
    %1367 = vmatpush1.msra.mxu0 0.0
    %1368 = vmatprep.subr.mxu0 0.0
    %1369 = vmatpush1.msra.mxu0 0.0
    %1370 = vmatprep.subr.mxu0 0.0
    %1371 = vmatpush1.msra.mxu0 0.0
    %1372 = vmatprep.subr.mxu0 0.0
    %1373 = vmatpush1.msra.mxu0 0.0
    %1374 = vmatprep.subr.mxu0 0.0
    %1375 = vmatpush1.msra.mxu0 0.0
    %1376 = vmatprep.subr.mxu0 0.0
    %1377 = vmatpush1.msra.mxu0 0.0
    %1378 = vmatprep.subr.mxu0 0.0
    %1379 = vmatpush1.msra.mxu0 0.0
    %1380 = vmatprep.subr.mxu0 0.0
    %1381 = vmatpush1.msra.mxu0 0.0
    %1382 = vmatprep.subr.mxu0 0.0
    %1383 = vmatpush1.msra.mxu0 0.0
    %1384 = vmatprep.subr.mxu0 0.0
    %1385 = vmatpush1.msra.mxu0 0.0
    %1386 = vmatprep.subr.mxu0 0.0
    %1387 = vmatpush1.msra.mxu0 0.0
    %1388 = vmatprep.subr.mxu0 0.0
    %1389 = vmatpush1.msra.mxu0 0.0
    %1390 = vmatprep.subr.mxu0 0.0
    %1391 = vmatpush1.msra.mxu0 0.0
    %1392 = vmatprep.subr.mxu0 0.0
    %1393 = vmatpush1.msra.mxu0 0.0
    %1394 = vmatprep.subr.mxu0 0.0
    %1395 = vmatpush1.msra.mxu0 0.0
    %1396 = vmatprep.subr.mxu0 0.0
    %1397 = vmatpush1.msra.mxu0 0.0
    %1398 = vmatprep.subr.mxu0 0.0
    %1399 = vmatpush1.msra.mxu0 0.0
    %1400 = vmatprep.subr.mxu0 0.0
    %1401 = vmatpush1.msra.mxu0 0.0
    %1402 = vmatprep.subr.mxu0 0.0
    %1403 = vmatpush1.msra.mxu0 0.0
    %1404 = vmatprep.subr.mxu0 0.0
    %1405 = vmatpush1.msra.mxu0 0.0
    %1406 = vmatprep.subr.mxu0 0.0
    %1407 = vmatpush1.msra.mxu0 0.0
    %1408 = vmatprep.subr.mxu0 0.0
    %1409 = vmatpush1.msra.mxu0 0.0
    %1410 = vmatprep.subr.mxu0 0.0
    %1411 = vmatpush1.msra.mxu0 0.0
    %1412 = vmatprep.mubr.f32.mxu0 0.0
    %1413 = vmatmul.mubr.f32.gmra.mrb[0].mxu0 %v1343
    %v1414 = vpop.f32.mrb[0].mxu0
    %v1415 = vadd.f32 0.0, %v1414
    %v1416 = vpop.f32.mrb[0].mxu0
    %1417 = vmatprep.mubr.f32.mxu0 0.0
    %1418 = vmatmul.mubr.f32.gmra.mrb[0].mxu0 %v1346
    %v1419 = vpop.f32.mrb[0].mxu0
    %v1420 = vadd.f32 0.0, %v1419
    %v1421 = vpop.f32.mrb[0].mxu0
    %1422 = vdwg.mxu0
    %v1424 = vsel %vm1341, %v1314, 0
    %v1427 = vsel %vm1341, %v1315, 0
    %1429 = vmatprep.subr.mxu0 0.0
    %1430 = vmatpush1.msra.mxu0 %v1318
    %1431 = vmatprep.subr.mxu0 0.0
    %1432 = vmatpush1.msra.mxu0 %v1319
    %1433 = vmatprep.subr.mxu0 0.0
    %1434 = vmatpush1.msra.mxu0 %v1320
    %1435 = vmatprep.subr.mxu0 0.0
    %1436 = vmatpush1.msra.mxu0 %v1321
    %1437 = vmatprep.subr.mxu0 0.0
    %1438 = vmatpush1.msra.mxu0 0.0
    %1439 = vmatprep.subr.mxu0 0.0
    %1440 = vmatpush1.msra.mxu0 0.0
    %1441 = vmatprep.subr.mxu0 0.0
    %1442 = vmatpush1.msra.mxu0 0.0
    %1443 = vmatprep.subr.mxu0 0.0
    %1444 = vmatpush1.msra.mxu0 0.0
    %1445 = vmatprep.subr.mxu0 0.0
    %1446 = vmatpush1.msra.mxu0 0.0
    %1447 = vmatprep.subr.mxu0 0.0
    %1448 = vmatpush1.msra.mxu0 0.0
    %1449 = vmatprep.subr.mxu0 0.0
    %1450 = vmatpush1.msra.mxu0 0.0
    %1451 = vmatprep.subr.mxu0 0.0
    %1452 = vmatpush1.msra.mxu0 0.0
    %1453 = vmatprep.subr.mxu0 0.0
    %1454 = vmatpush1.msra.mxu0 0.0
    %1455 = vmatprep.subr.mxu0 0.0
    %1456 = vmatpush1.msra.mxu0 0.0
    %1457 = vmatprep.subr.mxu0 0.0
    %1458 = vmatpush1.msra.mxu0 0.0
    %1459 = vmatprep.subr.mxu0 0.0
    %1460 = vmatpush1.msra.mxu0 0.0
    %1461 = vmatprep.subr.mxu0 0.0
    %1462 = vmatpush1.msra.mxu0 0.0
    %1463 = vmatprep.subr.mxu0 0.0
    %1464 = vmatpush1.msra.mxu0 0.0
    %1465 = vmatprep.subr.mxu0 0.0
    %1466 = vmatpush1.msra.mxu0 0.0
    %1467 = vmatprep.subr.mxu0 0.0
    %1468 = vmatpush1.msra.mxu0 0.0
    %1469 = vmatprep.subr.mxu0 0.0
    %1470 = vmatpush1.msra.mxu0 0.0
    %1471 = vmatprep.subr.mxu0 0.0
    %1472 = vmatpush1.msra.mxu0 0.0
    %1473 = vmatprep.subr.mxu0 0.0
    %1474 = vmatpush1.msra.mxu0 0.0
    %1475 = vmatprep.subr.mxu0 0.0
    %1476 = vmatpush1.msra.mxu0 0.0
    %1477 = vmatprep.subr.mxu0 0.0
    %1478 = vmatpush1.msra.mxu0 0.0
    %1479 = vmatprep.subr.mxu0 0.0
    %1480 = vmatpush1.msra.mxu0 0.0
    %1481 = vmatprep.subr.mxu0 0.0
    %1482 = vmatpush1.msra.mxu0 0.0
    %1483 = vmatprep.subr.mxu0 0.0
    %1484 = vmatpush1.msra.mxu0 0.0
    %1485 = vmatprep.subr.mxu0 0.0
    %1486 = vmatpush1.msra.mxu0 0.0
    %1487 = vmatprep.subr.mxu0 0.0
    %1488 = vmatpush1.msra.mxu0 0.0
    %1489 = vmatprep.subr.mxu0 0.0
    %1490 = vmatpush1.msra.mxu0 0.0
    %1491 = vmatprep.subr.mxu0 0.0
    %1492 = vmatpush1.msra.mxu0 0.0
    %1493 = vmatprep.mubr.f32.mxu0 0.0
    %1494 = vmatmul.mubr.f32.gmra.mrb[0].mxu0 %v1424
    %v1495 = vpop.f32.mrb[0].mxu0
    %v1496 = vadd.f32 %v1415, %v1495
    %v1497 = vpop.f32.mrb[0].mxu0
    %1498 = vmatprep.mubr.f32.mxu0 0.0
    %1499 = vmatmul.mubr.f32.gmra.mrb[0].mxu0 %v1427
    %v1500 = vpop.f32.mrb[0].mxu0
    %v1501 = vadd.f32 %v1420, %v1500
    %v1502 = vpop.f32.mrb[0].mxu0
    %1503 = vdwg.mxu0
    %v1504 = vmax.f32 %v1496, 0.0
    %v1505 = vmax.f32 %v1501, 0.0
    %v1506 = vsel %vm1341, %v1504, 0.0
    %1507 = vadd.xlane.f32.xlu0 %v1506
    %v1508 = vpop.xlane.xlu0 %1507
    %v1509 = vsel %vm1341, %v1505, 0.0
    %1510 = vadd.xlane.f32.xlu0 %v1509
    %v1511 = vpop.xlane.xlu0 %1510
    %v1512 = vrcp.pop 32.0
    %v1513 = vmul.f32 %v1508, %v1512
    %v1514 = vmul.f32 %v1511, %v1512
    %v1515 = vsub.f32 %v1504, %v1513
    %v1516 = vsub.f32 %v1505, %v1514
    %v1517 = vmul.f32 %v1515, %v1515
    %v1518 = vmul.f32 %v1516, %v1516
    %v1519 = vsel %vm1341, %v1517, 0.0
    %1520 = vadd.xlane.f32.xlu0 %v1519
    %v1521 = vpop.xlane.xlu0 %1520
    %v1522 = vsel %vm1341, %v1518, 0.0
    %1523 = vadd.xlane.f32.xlu0 %v1522
    %v1524 = vpop.xlane.xlu0 %1523
    %v1525 = vmul.f32 %v1521, %v1512
    %v1526 = vmul.f32 %v1524, %v1512
    %v1527 = vadd.f32 %v1525, 1e-05
    %v1528 = vadd.f32 %v1526, 1e-05
    %v1529 = vrsqrt.pop %v1527
    %v1530 = vrsqrt.pop %v1528
    %v1531 = vmul.f32 %v1515, %v1529
    %v1532 = vmul.f32 %v1516, %v1530
    %v1534 = vlaneseq
    %v1535 = vshrl.u32 %v1534, 7
    %v1536 = vsub.s32 0, %v1535
    %v1537 = vrot.slane %v1326, %v1536
    %v1539 = vmul.f32 %v1531, %v1537
    %v1540 = vmul.f32 %v1532, %v1537
    %v1542 = vlaneseq
    %v1543 = vshrl.u32 %v1542, 7
    %v1544 = vsub.s32 0, %v1543
    %v1545 = vrot.slane %v1327, %v1544
    %v1547 = vadd.f32 %v1539, %v1545
    %v1548 = vadd.f32 %v1540, %v1545
    %v1550 = vsel %vm1341, %v1547, 0
    %v1553 = vsel %vm1341, %v1548, 0
    %1555 = vmatprep.subr.mxu0 0.0
    %1556 = vmatpush1.msra.mxu0 %v1328
    %1557 = vmatprep.subr.mxu0 0.0
    %1558 = vmatpush1.msra.mxu0 %v1329
    %1559 = vmatprep.subr.mxu0 0.0
    %1560 = vmatpush1.msra.mxu0 %v1330
    %1561 = vmatprep.subr.mxu0 0.0
    %1562 = vmatpush1.msra.mxu0 %v1331
    %1563 = vmatprep.subr.mxu0 0.0
    %1564 = vmatpush1.msra.mxu0 0.0
    %1565 = vmatprep.subr.mxu0 0.0
    %1566 = vmatpush1.msra.mxu0 0.0
    %1567 = vmatprep.subr.mxu0 0.0
    %1568 = vmatpush1.msra.mxu0 0.0
    %1569 = vmatprep.subr.mxu0 0.0
    %1570 = vmatpush1.msra.mxu0 0.0
    %1571 = vmatprep.subr.mxu0 0.0
    %1572 = vmatpush1.msra.mxu0 0.0
    %1573 = vmatprep.subr.mxu0 0.0
    %1574 = vmatpush1.msra.mxu0 0.0
    %1575 = vmatprep.subr.mxu0 0.0
    %1576 = vmatpush1.msra.mxu0 0.0
    %1577 = vmatprep.subr.mxu0 0.0
    %1578 = vmatpush1.msra.mxu0 0.0
    %1579 = vmatprep.subr.mxu0 0.0
    %1580 = vmatpush1.msra.mxu0 0.0
    %1581 = vmatprep.subr.mxu0 0.0
    %1582 = vmatpush1.msra.mxu0 0.0
    %1583 = vmatprep.subr.mxu0 0.0
    %1584 = vmatpush1.msra.mxu0 0.0
    %1585 = vmatprep.subr.mxu0 0.0
    %1586 = vmatpush1.msra.mxu0 0.0
    %1587 = vmatprep.subr.mxu0 0.0
    %1588 = vmatpush1.msra.mxu0 0.0
    %1589 = vmatprep.subr.mxu0 0.0
    %1590 = vmatpush1.msra.mxu0 0.0
    %1591 = vmatprep.subr.mxu0 0.0
    %1592 = vmatpush1.msra.mxu0 0.0
    %1593 = vmatprep.subr.mxu0 0.0
    %1594 = vmatpush1.msra.mxu0 0.0
    %1595 = vmatprep.subr.mxu0 0.0
    %1596 = vmatpush1.msra.mxu0 0.0
    %1597 = vmatprep.subr.mxu0 0.0
    %1598 = vmatpush1.msra.mxu0 0.0
    %1599 = vmatprep.subr.mxu0 0.0
    %1600 = vmatpush1.msra.mxu0 0.0
    %1601 = vmatprep.subr.mxu0 0.0
    %1602 = vmatpush1.msra.mxu0 0.0
    %1603 = vmatprep.subr.mxu0 0.0
    %1604 = vmatpush1.msra.mxu0 0.0
    %1605 = vmatprep.subr.mxu0 0.0
    %1606 = vmatpush1.msra.mxu0 0.0
    %1607 = vmatprep.subr.mxu0 0.0
    %1608 = vmatpush1.msra.mxu0 0.0
    %1609 = vmatprep.subr.mxu0 0.0
    %1610 = vmatpush1.msra.mxu0 0.0
    %1611 = vmatprep.subr.mxu0 0.0
    %1612 = vmatpush1.msra.mxu0 0.0
    %1613 = vmatprep.subr.mxu0 0.0
    %1614 = vmatpush1.msra.mxu0 0.0
    %1615 = vmatprep.subr.mxu0 0.0
    %1616 = vmatpush1.msra.mxu0 0.0
    %1617 = vmatprep.subr.mxu0 0.0
    %1618 = vmatpush1.msra.mxu0 0.0
    %1619 = vmatprep.mubr.f32.mxu0 0.0
    %1620 = vmatmul.mubr.f32.gmra.mrb[0].mxu0 %v1550
    %v1621 = vpop.f32.mrb[0].mxu0
    %v1622 = vadd.f32 0.0, %v1621
    %v1623 = vpop.f32.mrb[0].mxu0
    %1624 = vmatprep.mubr.f32.mxu0 0.0
    %1625 = vmatmul.mubr.f32.gmra.mrb[0].mxu0 %v1553
    %v1626 = vpop.f32.mrb[0].mxu0
    %v1627 = vadd.f32 0.0, %v1626
    %v1628 = vpop.f32.mrb[0].mxu0
    %1629 = vdwg.mxu0
    %v1630 = vmax.f32 %v1622, 0.0
    %v1631 = vmax.f32 %v1627, 0.0
    %v1632 = vsel %vm1341, %v1630, 0.0
    %1633 = vadd.xlane.f32.xlu0 %v1632
    %v1634 = vpop.xlane.xlu0 %1633
    %v1635 = vsel %vm1341, %v1631, 0.0
    %1636 = vadd.xlane.f32.xlu0 %v1635
    %v1637 = vpop.xlane.xlu0 %1636
    %v1638 = vmul.f32 %v1634, %v1512
    %v1639 = vmul.f32 %v1637, %v1512
    %v1640 = vsub.f32 %v1630, %v1638
    %v1641 = vsub.f32 %v1631, %v1639
    %v1642 = vmul.f32 %v1640, %v1640
    %v1643 = vmul.f32 %v1641, %v1641
    %v1644 = vsel %vm1341, %v1642, 0.0
    %1645 = vadd.xlane.f32.xlu0 %v1644
    %v1646 = vpop.xlane.xlu0 %1645
    %v1647 = vsel %vm1341, %v1643, 0.0
    %1648 = vadd.xlane.f32.xlu0 %v1647
    %v1649 = vpop.xlane.xlu0 %1648
    %v1650 = vmul.f32 %v1646, %v1512
    %v1651 = vmul.f32 %v1649, %v1512
    %v1652 = vadd.f32 %v1650, 1e-05
    %v1653 = vadd.f32 %v1651, 1e-05
    %v1654 = vrsqrt.pop %v1652
    %v1655 = vrsqrt.pop %v1653
    %v1656 = vmul.f32 %v1640, %v1654
    %v1657 = vmul.f32 %v1641, %v1655
    %v1659 = vlaneseq
    %v1660 = vshrl.u32 %v1659, 7
    %v1661 = vsub.s32 0, %v1660
    %v1662 = vrot.slane %v1332, %v1661
    %v1664 = vmul.f32 %v1656, %v1662
    %v1665 = vmul.f32 %v1657, %v1662
    %v1667 = vlaneseq
    %v1668 = vshrl.u32 %v1667, 7
    %v1669 = vsub.s32 0, %v1668
    %v1670 = vrot.slane %v1333, %v1669
    %v1672 = vadd.f32 %v1664, %v1670
    %v1673 = vadd.f32 %v1665, %v1670
    %v1675 = vsel %vm222, %v1334, 0
    %1677 = vmatprep.subr.mxu0 0.0
    %1678 = vmatpush1.msra.mxu0 %v1675
    %1679 = vmatprep.subr.mxu0 0.0
    %1680 = vmatpush1.msra.mxu0 0.0
    %1681 = vmatprep.subr.mxu0 0.0
    %1682 = vmatpush1.msra.mxu0 0.0
    %1683 = vmatprep.subr.mxu0 0.0
    %1684 = vmatpush1.msra.mxu0 0.0
    %1685 = vmatprep.subr.mxu0 0.0
    %1686 = vmatpush1.msra.mxu0 0.0
    %1687 = vmatprep.subr.mxu0 0.0
    %1688 = vmatpush1.msra.mxu0 0.0
    %1689 = vmatprep.subr.mxu0 0.0
    %1690 = vmatpush1.msra.mxu0 0.0
    %1691 = vmatprep.subr.mxu0 0.0
    %1692 = vmatpush1.msra.mxu0 0.0
    %1693 = vmatprep.subr.mxu0 0.0
    %1694 = vmatpush1.msra.mxu0 0.0
    %1695 = vmatprep.subr.mxu0 0.0
    %1696 = vmatpush1.msra.mxu0 0.0
    %1697 = vmatprep.subr.mxu0 0.0
    %1698 = vmatpush1.msra.mxu0 0.0
    %1699 = vmatprep.subr.mxu0 0.0
    %1700 = vmatpush1.msra.mxu0 0.0
    %1701 = vmatprep.subr.mxu0 0.0
    %1702 = vmatpush1.msra.mxu0 0.0
    %1703 = vmatprep.subr.mxu0 0.0
    %1704 = vmatpush1.msra.mxu0 0.0
    %1705 = vmatprep.subr.mxu0 0.0
    %1706 = vmatpush1.msra.mxu0 0.0
    %1707 = vmatprep.subr.mxu0 0.0
    %1708 = vmatpush1.msra.mxu0 0.0
    %1709 = vmatprep.subr.mxu0 0.0
    %1710 = vmatpush1.msra.mxu0 0.0
    %1711 = vmatprep.subr.mxu0 0.0
    %1712 = vmatpush1.msra.mxu0 0.0
    %1713 = vmatprep.subr.mxu0 0.0
    %1714 = vmatpush1.msra.mxu0 0.0
    %1715 = vmatprep.subr.mxu0 0.0
    %1716 = vmatpush1.msra.mxu0 0.0
    %1717 = vmatprep.subr.mxu0 0.0
    %1718 = vmatpush1.msra.mxu0 0.0
    %1719 = vmatprep.subr.mxu0 0.0
    %1720 = vmatpush1.msra.mxu0 0.0
    %1721 = vmatprep.subr.mxu0 0.0
    %1722 = vmatpush1.msra.mxu0 0.0
    %1723 = vmatprep.subr.mxu0 0.0
    %1724 = vmatpush1.msra.mxu0 0.0
    %1725 = vmatprep.subr.mxu0 0.0
    %1726 = vmatpush1.msra.mxu0 0.0
    %1727 = vmatprep.subr.mxu0 0.0
    %1728 = vmatpush1.msra.mxu0 0.0
    %1729 = vmatprep.subr.mxu0 0.0
    %1730 = vmatpush1.msra.mxu0 0.0
    %1731 = vmatprep.subr.mxu0 0.0
    %1732 = vmatpush1.msra.mxu0 0.0
    %1733 = vmatprep.subr.mxu0 0.0
    %1734 = vmatpush1.msra.mxu0 0.0
    %1735 = vmatprep.subr.mxu0 0.0
    %1736 = vmatpush1.msra.mxu0 0.0
    %1737 = vmatprep.subr.mxu0 0.0
    %1738 = vmatpush1.msra.mxu0 0.0
    %1739 = vmatprep.subr.mxu0 0.0
    %1740 = vmatpush1.msra.mxu0 0.0
    %1741 = vmatprep.mubr.f32.mxu0 0.0
    %1742 = vmatmul.mubr.f32.gmra.mrb[0].mxu0 %v218
    %v1743 = vpop.f32.mrb[0].mxu0
    %v1744 = vadd.f32 0.0, %v1743
    %v1745 = vpop.f32.mrb[0].mxu0
    %1746 = vmatprep.mubr.f32.mxu0 0.0
    %1747 = vmatmul.mubr.f32.gmra.mrb[0].mxu0 %v220
    %v1748 = vpop.f32.mrb[0].mxu0
    %v1749 = vadd.f32 0.0, %v1748
    %v1750 = vpop.f32.mrb[0].mxu0
    %1751 = vdwg.mxu0
    %v1752 = vadd.f32 %v1672, %v1744
    %v1753 = vadd.f32 %v1673, %v1749
    %v1755 = vlaneseq
    %v1756 = vshrl.u32 %v1755, 7
    %v1757 = vsub.s32 0, %v1756
    %v1758 = vrot.slane %v1335, %v1757
    %v1760 = vadd.f32 %v1752, %v1758
    %v1761 = vadd.f32 %v1753, %v1758
    %v1763 = vlaneseq
    %v1764 = vshrl.u32 %v1763, 7
    %v1765 = vsub.s32 0, %v1764
    %v1766 = vrot.slane %v1340, %v1765
    %v1769 = vsel %vm1341, %v1760, 0
    %v1772 = vsel %vm1341, %v1761, 0
    %1774 = vmatprep.subr.mxu0 0.0
    %1775 = vmatpush1.msra.mxu0 %v1336
    %1776 = vmatprep.subr.mxu0 0.0
    %1777 = vmatpush1.msra.mxu0 %v1337
    %1778 = vmatprep.subr.mxu0 0.0
    %1779 = vmatpush1.msra.mxu0 %v1338
    %1780 = vmatprep.subr.mxu0 0.0
    %1781 = vmatpush1.msra.mxu0 %v1339
    %1782 = vmatprep.subr.mxu0 0.0
    %1783 = vmatpush1.msra.mxu0 0.0
    %1784 = vmatprep.subr.mxu0 0.0
    %1785 = vmatpush1.msra.mxu0 0.0
    %1786 = vmatprep.subr.mxu0 0.0
    %1787 = vmatpush1.msra.mxu0 0.0
    %1788 = vmatprep.subr.mxu0 0.0
    %1789 = vmatpush1.msra.mxu0 0.0
    %1790 = vmatprep.subr.mxu0 0.0
    %1791 = vmatpush1.msra.mxu0 0.0
    %1792 = vmatprep.subr.mxu0 0.0
    %1793 = vmatpush1.msra.mxu0 0.0
    %1794 = vmatprep.subr.mxu0 0.0
    %1795 = vmatpush1.msra.mxu0 0.0
    %1796 = vmatprep.subr.mxu0 0.0
    %1797 = vmatpush1.msra.mxu0 0.0
    %1798 = vmatprep.subr.mxu0 0.0
    %1799 = vmatpush1.msra.mxu0 0.0
    %1800 = vmatprep.subr.mxu0 0.0
    %1801 = vmatpush1.msra.mxu0 0.0
    %1802 = vmatprep.subr.mxu0 0.0
    %1803 = vmatpush1.msra.mxu0 0.0
    %1804 = vmatprep.subr.mxu0 0.0
    %1805 = vmatpush1.msra.mxu0 0.0
    %1806 = vmatprep.subr.mxu0 0.0
    %1807 = vmatpush1.msra.mxu0 0.0
    %1808 = vmatprep.subr.mxu0 0.0
    %1809 = vmatpush1.msra.mxu0 0.0
    %1810 = vmatprep.subr.mxu0 0.0
    %1811 = vmatpush1.msra.mxu0 0.0
    %1812 = vmatprep.subr.mxu0 0.0
    %1813 = vmatpush1.msra.mxu0 0.0
    %1814 = vmatprep.subr.mxu0 0.0
    %1815 = vmatpush1.msra.mxu0 0.0
    %1816 = vmatprep.subr.mxu0 0.0
    %1817 = vmatpush1.msra.mxu0 0.0
    %1818 = vmatprep.subr.mxu0 0.0
    %1819 = vmatpush1.msra.mxu0 0.0
    %1820 = vmatprep.subr.mxu0 0.0
    %1821 = vmatpush1.msra.mxu0 0.0
    %1822 = vmatprep.subr.mxu0 0.0
    %1823 = vmatpush1.msra.mxu0 0.0
    %1824 = vmatprep.subr.mxu0 0.0
    %1825 = vmatpush1.msra.mxu0 0.0
    %1826 = vmatprep.subr.mxu0 0.0
    %1827 = vmatpush1.msra.mxu0 0.0
    %1828 = vmatprep.subr.mxu0 0.0
    %1829 = vmatpush1.msra.mxu0 0.0
    %1830 = vmatprep.subr.mxu0 0.0
    %1831 = vmatpush1.msra.mxu0 0.0
    %1832 = vmatprep.subr.mxu0 0.0
    %1833 = vmatpush1.msra.mxu0 0.0
    %1834 = vmatprep.subr.mxu0 0.0
    %1835 = vmatpush1.msra.mxu0 0.0
    %1836 = vmatprep.subr.mxu0 0.0
    %1837 = vmatpush1.msra.mxu0 0.0
    %1838 = vmatprep.mubr.f32.mxu0 0.0
    %1839 = vmatmul.mubr.f32.gmra.mrb[0].mxu0 %v1769
    %v1840 = vpop.f32.mrb[0].mxu0
    %v1841 = vadd.f32 %v1766, %v1840
    %v1842 = vpop.f32.mrb[0].mxu0
    %1843 = vmatprep.mubr.f32.mxu0 0.0
    %1844 = vmatmul.mubr.f32.gmra.mrb[0].mxu0 %v1772
    %v1845 = vpop.f32.mrb[0].mxu0
    %v1846 = vadd.f32 %v1766, %v1845
    %v1847 = vpop.f32.mrb[0].mxu0
    %1848 = vdwg.mxu0
    %vm1849 = vcmask 15360
    %1850 = vst.msk [vmem:[%s16] sm:$0xff] %vm1849, %v1841
    %1851 = vst.msk [vmem:[%s16 + $0x8] sm:$0xff] %vm1849, %v1846
    // Predicated region
    $region82: #{lstm_model_forward.1} parent=1 // pred_check
      _
    $region83: #{lstm_model_forward.1} parent=1 // pred_check_branch
      %1853 = sbr.rel (0) target = $region85
    $region84: #{lstm_model_forward.1} parent=1 // pred_region
      _
    $region85: #{lstm_model_forward.1} parent=1 // pred_fallthru
      _
    // Predicated region
    $region86: #{lstm_model_forward.1} parent=1 // pred_check
      _
    $region87: #{lstm_model_forward.1} parent=1 // pred_check_branch
      %1855 = sbr.rel (0) target = $region89
    $region88: #{lstm_model_forward.1} parent=1 // pred_region
      _
    $region89: #{lstm_model_forward.1} parent=1 // pred_fallthru
      _
    %1856 = vsyncpa [#allocation5], 1
    %1857 = vsyncpa [#allocation7], 1
    %1858 = vsyncpa [#allocation10], 1

</llo_original>
